<compile_context>
chip_gen: v6e
topology: v6e:2x2x1
jax: 0.10.0
libtpu: 0.0.40
codegen_flags: <defaults>
</compile_context>

<pallas_src>
import math
import functools

import jax
import jax.numpy as jnp
from jax.experimental import pallas as pl
from jax.experimental.pallas import tpu as pltpu

# ----------------------------- config (small) -------------------------------
D_MODEL = 32
D_FF = 64
N_HEADS = 4
D_K = 8
D_V = 8
N_LAYERS = 2
SRC_VOCAB = 16
BATCH = 2
SRC_LEN = 8
LN_EPS = 1e-5  # PyTorch nn.LayerNorm default


def _layer_norm(x):
    # nn.LayerNorm(d_model) freshly constructed in forward => gamma=1, beta=0
    mean = jnp.mean(x, axis=-1, keepdims=True)
    var = jnp.mean((x - mean) ** 2, axis=-1, keepdims=True)
    return (x - mean) * jax.lax.rsqrt(var + LN_EPS)


def _encoder_kernel(
    x_ref, mask_ref, wqkv_ref, wo_ref, w1_ref, w2_ref,
    out_ref, attn_ref, x_sc, *, n_heads, d_k, d_v,
):
    layer = pl.program_id(1)
    n_layers = pl.num_programs(1)

    # Load fresh (embedding + PE) activations at layer 0 of each batch element;
    # afterwards the previous layer's output is carried in VMEM (x_sc).
    @pl.when(layer == 0)
    def _():
        x_sc[...] = x_ref[0].astype(jnp.float32)

    x = x_sc[...]                                             # [S, D]
    S, D = x.shape

    # Additive mask bias from the [1, S] pad row (1.0 == key position is PAD).
    bias = jnp.where(mask_ref[0] > 0.5, jnp.float32(-1e9), jnp.float32(0.0))  # [1, S]

    # ---- Multi-head self-attention (all heads batched) ----
    x_h = jnp.broadcast_to(x[None, :, :], (n_heads, S, D))    # [H, S, D]
    qkv = jnp.einsum('hsd,hdc->hsc', x_h, wqkv_ref[0],
                     preferred_element_type=jnp.float32)      # [H, S, dk+dk+dv]
    q = qkv[:, :, :d_k]
    k = qkv[:, :, d_k:2 * d_k]
    v = qkv[:, :, 2 * d_k:2 * d_k + d_v]

    scale = 1.0 / math.sqrt(d_k)
    scores = jnp.einsum('hqd,hkd->hqk', q, k,
                        preferred_element_type=jnp.float32) * scale   # [H, S, S]
    scores = scores + bias[None, :, :]                        # masked_fill_ equivalent
    scores = scores - jnp.max(scores, axis=-1, keepdims=True)
    e = jnp.exp(scores)
    probs = e * pl.reciprocal(jnp.sum(e, axis=-1, keepdims=True), approx=False)

    attn_ref[0] = probs.astype(attn_ref.dtype)                # one store, all heads

    ctx = jnp.einsum('hqk,hkd->hqd', probs, v,
                     preferred_element_type=jnp.float32)      # [H, S, dv]
    # Head-major output projection: sum_h ctx_h @ Wo_h == concat_h(ctx_h) @ Wo
    o_h = jnp.einsum('hqv,hvD->hqD', ctx, wo_ref[0],
                     preferred_element_type=jnp.float32)      # [H, S, D]
    attn_out = jnp.sum(o_h, axis=0)                           # [S, D]

    y = _layer_norm(attn_out + x)                             # residual + LN

    # ---- Position-wise feed-forward ----
    h1 = jnp.maximum(
        jnp.dot(y, w1_ref[0], preferred_element_type=jnp.float32), 0.0)
    h2 = jnp.dot(h1, w2_ref[0], preferred_element_type=jnp.float32)
    out = _layer_norm(h2 + y)                                 # residual + LN

    x_sc[...] = out                                           # carry to next layer

    @pl.when(layer == n_layers - 1)
    def _():
        out_ref[0] = out.astype(out_ref.dtype)


def encoder_pallas(x, pad_row, wqkv, wo, w1, w2):
    """Fused N_LAYERS encoder stack.

    x:       [B, S, D]   embeddings + positional encoding
    pad_row: [B, 1, S]   1.0 where the key token is PAD (== 0)
    wqkv:    [L, H, D, d_k + d_k + d_v]
    wo:      [L, H, d_v, D]
    w1:      [L, D, D_FF]
    w2:      [L, D_FF, D]
    returns (out [B, S, D], attn [L, B*H, S, S])
    """
    B, S, D = x.shape
    L, H = wqkv.shape[0], wqkv.shape[1]
    qkv_w = wqkv.shape[3]

    kernel = functools.partial(
        _encoder_kernel, n_heads=N_HEADS, d_k=D_K, d_v=D_V)

    return pl.pallas_call(
        kernel,
        out_shape=(
            jax.ShapeDtypeStruct((B, S, D), jnp.float32),
            jax.ShapeDtypeStruct((L, B * H, S, S), jnp.float32),
        ),
        grid_spec=pltpu.PrefetchScalarGridSpec(
            num_scalar_prefetch=0,
            grid=(B, L),                                    # layer axis last (carry)
            in_specs=[
                pl.BlockSpec((1, S, D), lambda b, l: (b, 0, 0)),          # x
                pl.BlockSpec((1, 1, S), lambda b, l: (b, 0, 0)),          # pad row
                pl.BlockSpec((1, H, D, qkv_w), lambda b, l: (l, 0, 0, 0)),  # Wqkv
                pl.BlockSpec((1, H, D_V, D), lambda b, l: (l, 0, 0, 0)),    # Wo
                pl.BlockSpec((1, D, D_FF), lambda b, l: (l, 0, 0)),         # W1
                pl.BlockSpec((1, D_FF, D), lambda b, l: (l, 0, 0)),         # W2
            ],
            out_specs=[
                pl.BlockSpec((1, S, D), lambda b, l: (b, 0, 0)),            # resident over l
                pl.BlockSpec((1, H, S, S), lambda b, l: (l, b, 0, 0)),      # per-layer attn
            ],
            scratch_shapes=[pltpu.VMEM((S, D), jnp.float32)],               # activation carry
        ),
        compiler_params=pltpu.CompilerParams(
            dimension_semantics=("parallel", "arbitrary")),
    )(x, pad_row, wqkv, wo, w1, w2)


def make_positional_encoding(max_len, d_model):
    position = jnp.arange(max_len, dtype=jnp.float32)[:, None]
    div_term = jnp.exp(
        jnp.arange(0, d_model, 2, dtype=jnp.float32) *
        (-math.log(10000.0) / d_model))
    pe = jnp.zeros((max_len, d_model), dtype=jnp.float32)
    pe = pe.at[:, 0::2].set(jnp.sin(position * div_term))
    pe = pe.at[:, 1::2].set(jnp.cos(position * div_term))
    return pe


def init_params(key):
    ks = jax.random.split(key, 5)
    scale = 0.1
    # Projection weights are stored stacked over layers and head-major:
    #   wqkv[l, h, :, 0:dk]        == columns h*dk:(h+1)*dk of the layer's W_Q
    #   wqkv[l, h, :, dk:2dk]      == same for W_K
    #   wqkv[l, h, :, 2dk:2dk+dv]  == same for W_V
    #   wo[l, h]                   == rows h*dv:(h+1)*dv of the layer's W_O
    return {
        "emb": scale * jax.random.normal(ks[0], (SRC_VOCAB, D_MODEL), jnp.float32),
        "wqkv": scale * jax.random.normal(
            ks[1], (N_LAYERS, N_HEADS, D_MODEL, 2 * D_K + D_V), jnp.float32),
        "wo": scale * jax.random.normal(
            ks[2], (N_LAYERS, N_HEADS, D_V, D_MODEL), jnp.float32),
        "w1": scale * jax.random.normal(
            ks[3], (N_LAYERS, D_MODEL, D_FF), jnp.float32),
        "w2": scale * jax.random.normal(
            ks[4], (N_LAYERS, D_FF, D_MODEL), jnp.float32),
    }


def encoder_forward(params, enc_inputs):
    """enc_inputs: int32 [batch, src_len] -> (enc_outputs [B,S,D], list of attn [B,H,S,S])"""
    B, S = enc_inputs.shape
    # src_emb: embedding lookup (glue)
    x = jnp.take(params["emb"], enc_inputs, axis=0)            # [B, S, D]
    # pos_emb: add positional encoding (equivalent to transpose/add/transpose)
    pe = make_positional_encoding(5000, D_MODEL)[:S]           # [S, D]
    x = x + pe[None, :, :]
    # TODO(synk): nn.Dropout(p=0.1) is stochastic in train mode; applied as identity (eval).

    # get_attn_pad_mask: key positions equal to 0 are masked; pass only the
    # [B, 1, S] pad row and broadcast inside the kernel.
    pad_row = (enc_inputs == 0).astype(jnp.float32)[:, None, :]    # [B, 1, S]

    out, attn_flat = encoder_pallas(
        x, pad_row, params["wqkv"], params["wo"], params["w1"], params["w2"])
    attn = attn_flat.reshape(N_LAYERS, B, N_HEADS, S, S)
    return out, [attn[l] for l in range(N_LAYERS)]


if __name__ == "__main__":
    key = jax.random.PRNGKey(0)
    pkey, ikey = jax.random.split(key)
    params = init_params(pkey)

    enc_inputs = jax.random.randint(ikey, (BATCH, SRC_LEN), 1, SRC_VOCAB, dtype=jnp.int32)
    # force some PAD (= 0) tokens so the attention mask is exercised
    enc_inputs = enc_inputs.at[:, -2:].set(0)

    enc_outputs, enc_self_attns = encoder_forward(params, enc_inputs)
    jax.block_until_ready(enc_outputs)
    for a in enc_self_attns:
        jax.block_until_ready(a)

    assert enc_outputs.shape == (BATCH, SRC_LEN, D_MODEL)
    assert len(enc_self_attns) == N_LAYERS
    assert enc_self_attns[0].shape == (BATCH, N_HEADS, SRC_LEN, SRC_LEN)
    assert bool(jnp.all(jnp.isfinite(enc_outputs)))
    # attention rows must sum to 1 (softmax) for every layer/head
    for a in enc_self_attns:
        assert bool(jnp.allclose(jnp.sum(a, axis=-1), 1.0, atol=1e-4))
    print("KERNEL_OK")
</pallas_src>

<mosaic_0001>
module attributes {stable_mosaic.version = 11 : i64} {
  func.func @_encoder_kernel(%arg0: i32, %arg1: i32, %arg2: memref<1x8x32xf32, #tpu.memory_space<vmem>>, %arg3: memref<1x1x8xf32, #tpu.memory_space<vmem>>, %arg4: memref<1x4x32x24xf32, #tpu.memory_space<vmem>>, %arg5: memref<1x4x8x32xf32, #tpu.memory_space<vmem>>, %arg6: memref<1x32x64xf32, #tpu.memory_space<vmem>>, %arg7: memref<1x64x32xf32, #tpu.memory_space<vmem>>, %arg8: memref<1x8x32xf32, #tpu.memory_space<vmem>>, %arg9: memref<1x4x8x8xf32, #tpu.memory_space<vmem>>, %arg10: memref<8x32xf32, #tpu.memory_space<vmem>>) attributes {dimension_semantics = [#tpu.dimension_semantics<parallel>, #tpu.dimension_semantics<arbitrary>], iteration_bounds = array<i64: 2, 2>, scalar_prefetch = 0 : i64, scratch_operands = 1 : i64, tpu.core_type = #tpu.core_type<tc>, window_params = [{transform_indices = @transform_0, window_bounds = array<i64: 1, 8, 32>}, {transform_indices = @transform_1, window_bounds = array<i64: 1, 1, 8>}, {transform_indices = @transform_2, window_bounds = array<i64: 1, 4, 32, 24>}, {transform_indices = @transform_3, window_bounds = array<i64: 1, 4, 8, 32>}, {transform_indices = @transform_4, window_bounds = array<i64: 1, 32, 64>}, {transform_indices = @transform_5, window_bounds = array<i64: 1, 64, 32>}, {transform_indices = @transform_6, window_bounds = array<i64: 1, 8, 32>}, {transform_indices = @transform_7, window_bounds = array<i64: 1, 4, 8, 8>}]} {
    %c0_i32 = arith.constant 0 : i32
    %0 = arith.cmpi eq, %arg1, %c0_i32 : i32
    %1 = arith.extui %0 : i1 to i32
    %c0_i32_0 = arith.constant 0 : i32
    %2 = arith.cmpi ne, %1, %c0_i32_0 : i32
    scf.if %2 {
      %c0_49 = arith.constant 0 : index
      %c0_50 = arith.constant 0 : index
      %c0_51 = arith.constant 0 : index
      %94 = vector.load %arg2[%c0_49, %c0_50, %c0_51] : memref<1x8x32xf32, #tpu.memory_space<vmem>>, vector<1x8x32xf32>
      %95 = vector.shape_cast %94 : vector<1x8x32xf32> to vector<8x32xf32>
      %c0_52 = arith.constant 0 : index
      %c0_53 = arith.constant 0 : index
      %96 = vector.load %arg10[%c0_52, %c0_53] : memref<8x32xf32, #tpu.memory_space<vmem>>, vector<8x32xf32>
      tpu.vector_store %arg10[%c0_52, %c0_53], %95 {strides = array<i32>} : memref<8x32xf32, #tpu.memory_space<vmem>>, vector<8x32xf32>,
    } else {
    }
    %c0 = arith.constant 0 : index
    %c0_1 = arith.constant 0 : index
    %3 = vector.load %arg10[%c0, %c0_1] : memref<8x32xf32, #tpu.memory_space<vmem>>, vector<8x32xf32>
    %c0_2 = arith.constant 0 : index
    %c0_3 = arith.constant 0 : index
    %c0_4 = arith.constant 0 : index
    %4 = vector.load %arg3[%c0_2, %c0_3, %c0_4] : memref<1x1x8xf32, #tpu.memory_space<vmem>>, vector<1x1x8xf32>
    %5 = vector.shape_cast %4 : vector<1x1x8xf32> to vector<1x8xf32>
    %cst = arith.constant 5.000000e-01 : f32
    %6 = vector.broadcast %cst : f32 to vector<1x8xf32>
    %7 = arith.cmpf ogt, %5, %6 : vector<1x8xf32>
    %cst_5 = arith.constant -1.000000e+09 : f32
    %cst_6 = arith.constant 0.000000e+00 : f32
    %8 = vector.broadcast %cst_5 : f32 to vector<1x8xf32>
    %9 = vector.broadcast %cst_6 : f32 to vector<1x8xf32>
    %10 = arith.select %7, %8, %9 : vector<1x8xi1>, vector<1x8xf32>
    %11 = vector.shape_cast %3 : vector<8x32xf32> to vector<1x8x32xf32>
    %12 = vector.shape_cast %11 : vector<1x8x32xf32> to vector<1x8x32xf32>
    %13 = vector.broadcast %12 : vector<1x8x32xf32> to vector<4x8x32xf32>
    %c0_7 = arith.constant 0 : index
    %c0_8 = arith.constant 0 : index
    %c0_9 = arith.constant 0 : index
    %c0_10 = arith.constant 0 : index
    %14 = vector.load %arg4[%c0_7, %c0_8, %c0_9, %c0_10] : memref<1x4x32x24xf32, #tpu.memory_space<vmem>>, vector<1x4x32x24xf32>
    %15 = vector.shape_cast %14 : vector<1x4x32x24xf32> to vector<4x32x24xf32>
    "tpu.trace_start"() <{level = 10 : i32, message = "hsd,hdc->hsc"}> : () -> ()
    %cst_11 = arith.constant dense<0.000000e+00> : vector<4x8x24xf32>
    %16 = tpu.matmul %13, %15, %cst_11 {dimension_numbers = #tpu.dot_dimension_numbers<[2], [1], [1], [2], [0, 0, 0, 1, 1, 2], [0], [0]>} : vector<4x8x32xf32>, vector<4x32x24xf32>, vector<4x8x24xf32> -> vector<4x8x24xf32>
    "tpu.trace_stop"() : () -> ()
    %17 = vector.extract_strided_slice %16 {offsets = [0, 0, 0], sizes = [4, 8, 8], strides = [1, 1, 1]} : vector<4x8x24xf32> to vector<4x8x8xf32>
    %18 = vector.extract_strided_slice %16 {offsets = [0, 0, 8], sizes = [4, 8, 8], strides = [1, 1, 1]} : vector<4x8x24xf32> to vector<4x8x8xf32>
    %19 = vector.extract_strided_slice %16 {offsets = [0, 0, 16], sizes = [4, 8, 8], strides = [1, 1, 1]} : vector<4x8x24xf32> to vector<4x8x8xf32>
    "tpu.trace_start"() <{level = 10 : i32, message = "hqd,hkd->hqk"}> : () -> ()
    %cst_12 = arith.constant dense<0.000000e+00> : vector<4x8x8xf32>
    %20 = tpu.matmul %17, %18, %cst_12 {dimension_numbers = #tpu.dot_dimension_numbers<[2], [2], [1], [1], [0, 0, 0, 1, 1, 1], [0], [0]>} : vector<4x8x8xf32>, vector<4x8x8xf32>, vector<4x8x8xf32> -> vector<4x8x8xf32>
    "tpu.trace_stop"() : () -> ()
    %cst_13 = arith.constant 0.353553385 : f32
    %21 = vector.broadcast %cst_13 : f32 to vector<4x8x8xf32>
    %22 = arith.mulf %20, %21 : vector<4x8x8xf32>
    %23 = vector.shape_cast %10 : vector<1x8xf32> to vector<1x1x8xf32>
    %24 = vector.broadcast %23 : vector<1x1x8xf32> to vector<4x8x8xf32>
    %25 = arith.addf %22, %24 : vector<4x8x8xf32>
    %cst_14 = arith.constant dense<0xFF800000> : vector<4x8xf32>
    %26 = vector.multi_reduction <maximumf>, %25, %cst_14 [2] : vector<4x8x8xf32> to vector<4x8xf32>
    %27 = vector.shape_cast %26 : vector<4x8xf32> to vector<4x8x1xf32>
    %28 = vector.broadcast %27 : vector<4x8x1xf32> to vector<4x8x8xf32>
    %29 = arith.subf %25, %28 : vector<4x8x8xf32>
    %30 = math.exp %29 : vector<4x8x8xf32>
    %cst_15 = arith.constant dense<0.000000e+00> : vector<4x8xf32>
    %31 = vector.multi_reduction <add>, %30, %cst_15 [2] : vector<4x8x8xf32> to vector<4x8xf32>
    %32 = vector.shape_cast %31 : vector<4x8xf32> to vector<4x8x1xf32>
    %33 = tpu.reciprocal %32 : vector<4x8x1xf32> -> vector<4x8x1xf32>
    %34 = vector.broadcast %33 : vector<4x8x1xf32> to vector<4x8x8xf32>
    %35 = arith.mulf %30, %34 : vector<4x8x8xf32>
    %c0_16 = arith.constant 0 : index
    %c0_17 = arith.constant 0 : index
    %c0_18 = arith.constant 0 : index
    %c0_19 = arith.constant 0 : index
    %36 = vector.load %arg9[%c0_16, %c0_17, %c0_18, %c0_19] : memref<1x4x8x8xf32, #tpu.memory_space<vmem>>, vector<1x4x8x8xf32>
    %37 = vector.shape_cast %36 : vector<1x4x8x8xf32> to vector<4x8x8xf32>
    %38 = vector.shape_cast %35 : vector<4x8x8xf32> to vector<1x4x8x8xf32>
    tpu.vector_store %arg9[%c0_16, %c0_17, %c0_18, %c0_19], %38 {strides = array<i32>} : memref<1x4x8x8xf32, #tpu.memory_space<vmem>>, vector<1x4x8x8xf32>,
    "tpu.trace_start"() <{level = 10 : i32, message = "hqk,hkd->hqd"}> : () -> ()
    %cst_20 = arith.constant dense<0.000000e+00> : vector<4x8x8xf32>
    %39 = tpu.matmul %35, %19, %cst_20 {dimension_numbers = #tpu.dot_dimension_numbers<[2], [1], [1], [2], [0, 0, 0, 1, 1, 2], [0], [0]>} : vector<4x8x8xf32>, vector<4x8x8xf32>, vector<4x8x8xf32> -> vector<4x8x8xf32>
    "tpu.trace_stop"() : () -> ()
    %c0_21 = arith.constant 0 : index
    %c0_22 = arith.constant 0 : index
    %c0_23 = arith.constant 0 : index
    %c0_24 = arith.constant 0 : index
    %40 = vector.load %arg5[%c0_21, %c0_22, %c0_23, %c0_24] : memref<1x4x8x32xf32, #tpu.memory_space<vmem>>, vector<1x4x8x32xf32>
    %41 = vector.shape_cast %40 : vector<1x4x8x32xf32> to vector<4x8x32xf32>
    "tpu.trace_start"() <{level = 10 : i32, message = "hqv,hvD->hqD"}> : () -> ()
    %cst_25 = arith.constant dense<0.000000e+00> : vector<4x8x32xf32>
    %42 = tpu.matmul %39, %41, %cst_25 {dimension_numbers = #tpu.dot_dimension_numbers<[2], [1], [1], [2], [0, 0, 0, 1, 1, 2], [0], [0]>} : vector<4x8x8xf32>, vector<4x8x32xf32>, vector<4x8x32xf32> -> vector<4x8x32xf32>
    "tpu.trace_stop"() : () -> ()
    %cst_26 = arith.constant dense<0.000000e+00> : vector<8x32xf32>
    %43 = vector.multi_reduction <add>, %42, %cst_26 [0] : vector<4x8x32xf32> to vector<8x32xf32>
    %44 = arith.addf %43, %3 : vector<8x32xf32>
    %cst_27 = arith.constant dense<0.000000e+00> : vector<8xf32>
    %45 = vector.multi_reduction <add>, %44, %cst_27 [1] : vector<8x32xf32> to vector<8xf32>
    %46 = vector.shape_cast %45 : vector<8xf32> to vector<8x1xf32>
    %cst_28 = arith.constant 3.200000e+01 : f32
    %47 = vector.broadcast %cst_28 : f32 to vector<8x1xf32>
    %48 = arith.divf %46, %47 : vector<8x1xf32>
    %49 = vector.broadcast %48 : vector<8x1xf32> to vector<8x32xf32>
    %50 = arith.subf %44, %49 : vector<8x32xf32>
    %51 = arith.mulf %50, %50 : vector<8x32xf32>
    %cst_29 = arith.constant dense<0.000000e+00> : vector<8xf32>
    %52 = vector.multi_reduction <add>, %51, %cst_29 [1] : vector<8x32xf32> to vector<8xf32>
    %53 = vector.shape_cast %52 : vector<8xf32> to vector<8x1xf32>
    %cst_30 = arith.constant 3.200000e+01 : f32
    %54 = vector.broadcast %cst_30 : f32 to vector<8x1xf32>
    %55 = arith.divf %53, %54 : vector<8x1xf32>
    %56 = vector.broadcast %48 : vector<8x1xf32> to vector<8x32xf32>
    %57 = arith.subf %44, %56 : vector<8x32xf32>
    %cst_31 = arith.constant 9.99999974E-6 : f32
    %58 = vector.broadcast %cst_31 : f32 to vector<8x1xf32>
    %59 = arith.addf %55, %58 : vector<8x1xf32>
    %60 = math.rsqrt %59 : vector<8x1xf32>
    %61 = vector.broadcast %60 : vector<8x1xf32> to vector<8x32xf32>
    %62 = arith.mulf %57, %61 : vector<8x32xf32>
    %c0_32 = arith.constant 0 : index
    %c0_33 = arith.constant 0 : index
    %c0_34 = arith.constant 0 : index
    %63 = vector.load %arg6[%c0_32, %c0_33, %c0_34] : memref<1x32x64xf32, #tpu.memory_space<vmem>>, vector<1x32x64xf32>
    %64 = vector.shape_cast %63 : vector<1x32x64xf32> to vector<32x64xf32>
    %cst_35 = arith.constant dense<0.000000e+00> : vector<8x64xf32>
    %65 = tpu.matmul %62, %64, %cst_35 {dimension_numbers = #tpu.dot_dimension_numbers<[1], [0], [0], [1], [0, 0, 1, 1], [], []>} : vector<8x32xf32>, vector<32x64xf32>, vector<8x64xf32> -> vector<8x64xf32>
    %cst_36 = arith.constant 0.000000e+00 : f32
    %66 = vector.broadcast %cst_36 : f32 to vector<8x64xf32>
    %67 = arith.maximumf %65, %66 : vector<8x64xf32>
    %c0_37 = arith.constant 0 : index
    %c0_38 = arith.constant 0 : index
    %c0_39 = arith.constant 0 : index
    %68 = vector.load %arg7[%c0_37, %c0_38, %c0_39] : memref<1x64x32xf32, #tpu.memory_space<vmem>>, vector<1x64x32xf32>
    %69 = vector.shape_cast %68 : vector<1x64x32xf32> to vector<64x32xf32>
    %cst_40 = arith.constant dense<0.000000e+00> : vector<8x32xf32>
    %70 = tpu.matmul %67, %69, %cst_40 {dimension_numbers = #tpu.dot_dimension_numbers<[1], [0], [0], [1], [0, 0, 1, 1], [], []>} : vector<8x64xf32>, vector<64x32xf32>, vector<8x32xf32> -> vector<8x32xf32>
    %71 = arith.addf %70, %62 : vector<8x32xf32>
    %cst_41 = arith.constant dense<0.000000e+00> : vector<8xf32>
    %72 = vector.multi_reduction <add>, %71, %cst_41 [1] : vector<8x32xf32> to vector<8xf32>
    %73 = vector.shape_cast %72 : vector<8xf32> to vector<8x1xf32>
    %cst_42 = arith.constant 3.200000e+01 : f32
    %74 = vector.broadcast %cst_42 : f32 to vector<8x1xf32>
    %75 = arith.divf %73, %74 : vector<8x1xf32>
    %76 = vector.broadcast %75 : vector<8x1xf32> to vector<8x32xf32>
    %77 = arith.subf %71, %76 : vector<8x32xf32>
    %78 = arith.mulf %77, %77 : vector<8x32xf32>
    %cst_43 = arith.constant dense<0.000000e+00> : vector<8xf32>
    %79 = vector.multi_reduction <add>, %78, %cst_43 [1] : vector<8x32xf32> to vector<8xf32>
    %80 = vector.shape_cast %79 : vector<8xf32> to vector<8x1xf32>
    %cst_44 = arith.constant 3.200000e+01 : f32
    %81 = vector.broadcast %cst_44 : f32 to vector<8x1xf32>
    %82 = arith.divf %80, %81 : vector<8x1xf32>
    %83 = vector.broadcast %75 : vector<8x1xf32> to vector<8x32xf32>
    %84 = arith.subf %71, %83 : vector<8x32xf32>
    %cst_45 = arith.constant 9.99999974E-6 : f32
    %85 = vector.broadcast %cst_45 : f32 to vector<8x1xf32>
    %86 = arith.addf %82, %85 : vector<8x1xf32>
    %87 = math.rsqrt %86 : vector<8x1xf32>
    %88 = vector.broadcast %87 : vector<8x1xf32> to vector<8x32xf32>
    %89 = arith.mulf %84, %88 : vector<8x32xf32>
    %c0_46 = arith.constant 0 : index
    %c0_47 = arith.constant 0 : index
    %90 = vector.load %arg10[%c0_46, %c0_47] : memref<8x32xf32, #tpu.memory_space<vmem>>, vector<8x32xf32>
    tpu.vector_store %arg10[%c0_46, %c0_47], %89 {strides = array<i32>} : memref<8x32xf32, #tpu.memory_space<vmem>>, vector<8x32xf32>,
    %c1_i32 = arith.constant 1 : i32
    %91 = arith.cmpi eq, %arg1, %c1_i32 : i32
    %92 = arith.extui %91 : i1 to i32
    %c0_i32_48 = arith.constant 0 : i32
    %93 = arith.cmpi ne, %92, %c0_i32_48 : i32
    scf.if %93 {
      %c0_49 = arith.constant 0 : index
      %c0_50 = arith.constant 0 : index
      %c0_51 = arith.constant 0 : index
      %94 = vector.load %arg8[%c0_49, %c0_50, %c0_51] : memref<1x8x32xf32, #tpu.memory_space<vmem>>, vector<1x8x32xf32>
      %95 = vector.shape_cast %94 : vector<1x8x32xf32> to vector<8x32xf32>
      %96 = vector.shape_cast %89 : vector<8x32xf32> to vector<1x8x32xf32>
      tpu.vector_store %arg8[%c0_49, %c0_50, %c0_51], %96 {strides = array<i32>} : memref<1x8x32xf32, #tpu.memory_space<vmem>>, vector<1x8x32xf32>,
    } else {
    }
    return
  }
  func.func @transform_0(%arg0: i32, %arg1: i32) -> (i32, i32, i32) {
    %c0_i32 = arith.constant 0 : i32
    %c0_i32_0 = arith.constant 0 : i32
    %c0_i32_1 = arith.constant 0 : i32
    return %arg0, %c0_i32, %c0_i32_0 : i32, i32, i32
  }
  func.func @transform_1(%arg0: i32, %arg1: i32) -> (i32, i32, i32) {
    %c0_i32 = arith.constant 0 : i32
    %c0_i32_0 = arith.constant 0 : i32
    %c0_i32_1 = arith.constant 0 : i32
    return %arg0, %c0_i32, %c0_i32_0 : i32, i32, i32
  }
  func.func @transform_2(%arg0: i32, %arg1: i32) -> (i32, i32, i32, i32) {
    %c0_i32 = arith.constant 0 : i32
    %c0_i32_0 = arith.constant 0 : i32
    %c0_i32_1 = arith.constant 0 : i32
    %c0_i32_2 = arith.constant 0 : i32
    return %arg1, %c0_i32, %c0_i32_0, %c0_i32_1 : i32, i32, i32, i32
  }
  func.func @transform_3(%arg0: i32, %arg1: i32) -> (i32, i32, i32, i32) {
    %c0_i32 = arith.constant 0 : i32
    %c0_i32_0 = arith.constant 0 : i32
    %c0_i32_1 = arith.constant 0 : i32
    %c0_i32_2 = arith.constant 0 : i32
    return %arg1, %c0_i32, %c0_i32_0, %c0_i32_1 : i32, i32, i32, i32
  }
  func.func @transform_4(%arg0: i32, %arg1: i32) -> (i32, i32, i32) {
    %c0_i32 = arith.constant 0 : i32
    %c0_i32_0 = arith.constant 0 : i32
    %c0_i32_1 = arith.constant 0 : i32
    return %arg1, %c0_i32, %c0_i32_0 : i32, i32, i32
  }
  func.func @transform_5(%arg0: i32, %arg1: i32) -> (i32, i32, i32) {
    %c0_i32 = arith.constant 0 : i32
    %c0_i32_0 = arith.constant 0 : i32
    %c0_i32_1 = arith.constant 0 : i32
    return %arg1, %c0_i32, %c0_i32_0 : i32, i32, i32
  }
  func.func @transform_6(%arg0: i32, %arg1: i32) -> (i32, i32, i32) {
    %c0_i32 = arith.constant 0 : i32
    %c0_i32_0 = arith.constant 0 : i32
    %c0_i32_1 = arith.constant 0 : i32
    return %arg0, %c0_i32, %c0_i32_0 : i32, i32, i32
  }
  func.func @transform_7(%arg0: i32, %arg1: i32) -> (i32, i32, i32, i32) {
    %c0_i32 = arith.constant 0 : i32
    %c0_i32_0 = arith.constant 0 : i32
    %c0_i32_1 = arith.constant 0 : i32
    return %arg1, %arg0, %c0_i32, %c0_i32_0 : i32, i32, i32, i32
  }
}

</mosaic_0001>

<llo_original>
// kernel: tpu_custom_call.1
$region0: #{tpu_custom_call.1}
  #allocation0 [shape = 'u32[]', space=smem, size = 0x4, offset = 0x4, fixed_abs, tag = 'smem constant byte address 0x4 - core index']
  #allocation1 [shape = 'u32[144,128]{1,0:T(1,128)}', space=vmem, size = 0x12000, scoped, tag = 'internal scratch']
  #allocation2 [shape = 'f32[8,32]{1,0:T(8,128)}', space=vmem, size = 0x1000, scoped, tag = 'scratch operand']
  %s0 = inlined_call_operand.vmem [shape: f32[2,8,32], index: 0, kind: input, shape index: {}]
  %s1 = inlined_call_operand.vmem [shape: f32[2,1,8], index: 1, kind: input, shape index: {}]
  %s2 = inlined_call_operand.vmem [shape: f32[2,4,32,24], index: 2, kind: input, shape index: {}]
  %s3 = inlined_call_operand.vmem [shape: f32[2,4,8,32], index: 3, kind: input, shape index: {}]
  %s4 = inlined_call_operand.vmem [shape: f32[2,32,64], index: 4, kind: input, shape index: {}]
  %s5 = inlined_call_operand.vmem [shape: f32[2,64,32], index: 5, kind: input, shape index: {}]
  %s6 = inlined_call_operand.hbm [shape: f32[2,8,32], index: 6, kind: output, shape index: {0}]
  %s7 = inlined_call_operand.hbm [shape: f32[2,8,8,8], index: 7, kind: output, shape index: {1}]
  %8 = xla_tuple %s6, %s7
  %s9 = sld [smem:[#allocation0]]
  $region73: #{tpu_custom_call.1} parent=0
    _
  %s11 = ssub.s32 1, %s9
  %s12 = scalar_select 0, %s11, %s9
  $region1: #{tpu_custom_call.1} parent=0
    #allocation3 [shape = 'u8[8192]{0}', space=vmem, size = 0x2000, scoped, tag = 'output window, operand 0']
    #allocation4 [shape = 's32[2]{0}', space=sflag, size = 0x8, scoped, tag = 'scoped memory for tpu_custom_call.1']
    #allocation5 [shape = 'u8[32768]{0}', space=vmem, size = 0x8000, scoped, tag = 'output window, operand 1']
    #allocation6 [shape = 's32[2]{0}', space=sflag, size = 0x8, scoped, tag = 'scoped memory for tpu_custom_call.1']
    %13 = vsyncpa [#allocation4], 0
    %s14 = scalar_lea.sflag [#allocation4], 1
    %15 = vsyncpa %s14, 0
    %16 = vsyncpa [#allocation6], 0
    %s17 = scalar_lea.sflag [#allocation6], 1
    %18 = vsyncpa %s17, 0
    loop: start=0, step=1, limit=6
    $region2: #{tpu_custom_call.1} parent=1 // loop_pre_header
      _
    $region3: #{tpu_custom_call.1} parent=1 // loop_header
      %s20 = sphi 0, %s24
      %p21 = scmp.ge.s32.totalorder %s20, 6
      %s27 = sphi 0, %s39
      %s28 = sphi 0, %s35
      %s29 = sphi 0, %s27
      %s30 = sphi 0, %s28
      %s31 = sphi 0, %s29
      %s32 = sphi 0, %s30
      %s42 = sphi 0, %s44
      %s45 = sphi 0, %s42
      %s46 = sphi 0, %s45
      %s62 = sphi 0, %s46
      %s68 = sphi 0, %s70
      %s71 = sphi 0, %s68
      %s72 = sphi 0, %s71
      %s88 = sphi 0, %s72
      %s94 = sphi 0, %s96
      %s97 = sphi 0, %s94
      %s98 = sphi 0, %s97
      %s114 = sphi 0, %s98
      %s120 = sphi 0, %s122
      %s123 = sphi 0, %s120
      %s124 = sphi 0, %s123
      %s140 = sphi 0, %s124
      %s146 = sphi 0, %s148
      %s149 = sphi 0, %s146
      %s150 = sphi 0, %s149
      %s166 = sphi 0, %s150
      %s172 = sphi 0, %s174
      %s175 = sphi 0, %s172
      %s176 = sphi 0, %s175
      %s192 = sphi 0, %s176
      %s198 = sphi 0, %s200
      %s201 = sphi 0, %s198
      %s202 = sphi 0, %s201
      %s218 = sphi 0, %s202
      %s226 = sphi 0, %s228
      %s229 = sphi 0, %s226
      %s230 = sphi 0, %s229
      %s246 = sphi 0, %s230
    $region4: #{tpu_custom_call.1} parent=1 // loop_header_branch
      %23 = sbr.rel (%p21) target = $region8
    $region5: #{tpu_custom_call.1} parent=1 // loop_body
      %s25 = ssub.s32 %s20, 1
      %s26 = ssub.s32 %s20, 2
      %s33 = sadd.s32 1, %s28
      %p34 = scmp.ge.s32.totalorder %s33, 2
      %s35 = scalar_select %p34, 0, %s33
      %s36 = sadd.s32 1, %s27
      %s37 = scalar_select %p34, %s36, %s27
      %p38 = scmp.ge.s32.totalorder %s37, 2
      %s39 = scalar_select %p38, 0, %s37
      %s40 = ssub.s32 %s27, %s39
      %p41 = scmp.eq.s32.totalorder %s40, 0
      %s43 = sadd.s32 %s42, 1
      %s44 = scalar_select %p41, %s42, %s43
      %p47 = pneg %p41
      %p48 = scmp.eq.s32.totalorder %s20, 3
      %p49 = por %p47, %p48
      %p50 = scmp.ne.s32.totalorder %s42, %s45
      %p51 = scmp.eq.s32.totalorder %s20, 0
      %p52 = por %p50, %p51
      %p53 = scmp.ne.s32.totalorder %s42, %s45
      %p54 = scmp.eq.s32.totalorder %s25, 3
      %p55 = por %p53, %p54
      %p56 = scmp.ne.s32.totalorder %s45, %s46
      %p57 = scmp.eq.s32.totalorder %s25, 0
      %p58 = por %p56, %p57
      %p59 = scmp.ne.s32.totalorder %s45, %s46
      %p60 = scmp.eq.s32.totalorder %s26, 3
      %p61 = por %p59, %p60
      %p63 = scmp.ne.s32.totalorder %s46, %s62
      %p64 = scmp.eq.s32.totalorder %s26, 0
      %p65 = por %p63, %p64
      %s66 = ssub.s32 %s27, %s39
      %p67 = scmp.eq.s32.totalorder %s66, 0
      %s69 = sadd.s32 %s68, 1
      %s70 = scalar_select %p67, %s68, %s69
      %p73 = pneg %p67
      %p74 = scmp.eq.s32.totalorder %s20, 3
      %p75 = por %p73, %p74
      %p76 = scmp.ne.s32.totalorder %s68, %s71
      %p77 = scmp.eq.s32.totalorder %s20, 0
      %p78 = por %p76, %p77
      %p79 = scmp.ne.s32.totalorder %s68, %s71
      %p80 = scmp.eq.s32.totalorder %s25, 3
      %p81 = por %p79, %p80
      %p82 = scmp.ne.s32.totalorder %s71, %s72
      %p83 = scmp.eq.s32.totalorder %s25, 0
      %p84 = por %p82, %p83
      %p85 = scmp.ne.s32.totalorder %s71, %s72
      %p86 = scmp.eq.s32.totalorder %s26, 3
      %p87 = por %p85, %p86
      %p89 = scmp.ne.s32.totalorder %s72, %s88
      %p90 = scmp.eq.s32.totalorder %s26, 0
      %p91 = por %p89, %p90
      %s92 = ssub.s32 %s28, %s35
      %p93 = scmp.eq.s32.totalorder %s92, 0
      %s95 = sadd.s32 %s94, 1
      %s96 = scalar_select %p93, %s94, %s95
      %p99 = pneg %p93
      %p100 = scmp.eq.s32.totalorder %s20, 3
      %p101 = por %p99, %p100
      %p102 = scmp.ne.s32.totalorder %s94, %s97
      %p103 = scmp.eq.s32.totalorder %s20, 0
      %p104 = por %p102, %p103
      %p105 = scmp.ne.s32.totalorder %s94, %s97
      %p106 = scmp.eq.s32.totalorder %s25, 3
      %p107 = por %p105, %p106
      %p108 = scmp.ne.s32.totalorder %s97, %s98
      %p109 = scmp.eq.s32.totalorder %s25, 0
      %p110 = por %p108, %p109
      %p111 = scmp.ne.s32.totalorder %s97, %s98
      %p112 = scmp.eq.s32.totalorder %s26, 3
      %p113 = por %p111, %p112
      %p115 = scmp.ne.s32.totalorder %s98, %s114
      %p116 = scmp.eq.s32.totalorder %s26, 0
      %p117 = por %p115, %p116
      %s118 = ssub.s32 %s28, %s35
      %p119 = scmp.eq.s32.totalorder %s118, 0
      %s121 = sadd.s32 %s120, 1
      %s122 = scalar_select %p119, %s120, %s121
      %p125 = pneg %p119
      %p126 = scmp.eq.s32.totalorder %s20, 3
      %p127 = por %p125, %p126
      %p128 = scmp.ne.s32.totalorder %s120, %s123
      %p129 = scmp.eq.s32.totalorder %s20, 0
      %p130 = por %p128, %p129
      %p131 = scmp.ne.s32.totalorder %s120, %s123
      %p132 = scmp.eq.s32.totalorder %s25, 3
      %p133 = por %p131, %p132
      %p134 = scmp.ne.s32.totalorder %s123, %s124
      %p135 = scmp.eq.s32.totalorder %s25, 0
      %p136 = por %p134, %p135
      %p137 = scmp.ne.s32.totalorder %s123, %s124
      %p138 = scmp.eq.s32.totalorder %s26, 3
      %p139 = por %p137, %p138
      %p141 = scmp.ne.s32.totalorder %s124, %s140
      %p142 = scmp.eq.s32.totalorder %s26, 0
      %p143 = por %p141, %p142
      %s144 = ssub.s32 %s28, %s35
      %p145 = scmp.eq.s32.totalorder %s144, 0
      %s147 = sadd.s32 %s146, 1
      %s148 = scalar_select %p145, %s146, %s147
      %p151 = pneg %p145
      %p152 = scmp.eq.s32.totalorder %s20, 3
      %p153 = por %p151, %p152
      %p154 = scmp.ne.s32.totalorder %s146, %s149
      %p155 = scmp.eq.s32.totalorder %s20, 0
      %p156 = por %p154, %p155
      %p157 = scmp.ne.s32.totalorder %s146, %s149
      %p158 = scmp.eq.s32.totalorder %s25, 3
      %p159 = por %p157, %p158
      %p160 = scmp.ne.s32.totalorder %s149, %s150
      %p161 = scmp.eq.s32.totalorder %s25, 0
      %p162 = por %p160, %p161
      %p163 = scmp.ne.s32.totalorder %s149, %s150
      %p164 = scmp.eq.s32.totalorder %s26, 3
      %p165 = por %p163, %p164
      %p167 = scmp.ne.s32.totalorder %s150, %s166
      %p168 = scmp.eq.s32.totalorder %s26, 0
      %p169 = por %p167, %p168
      %s170 = ssub.s32 %s28, %s35
      %p171 = scmp.eq.s32.totalorder %s170, 0
      %s173 = sadd.s32 %s172, 1
      %s174 = scalar_select %p171, %s172, %s173
      %p177 = pneg %p171
      %p178 = scmp.eq.s32.totalorder %s20, 3
      %p179 = por %p177, %p178
      %p180 = scmp.ne.s32.totalorder %s172, %s175
      %p181 = scmp.eq.s32.totalorder %s20, 0
      %p182 = por %p180, %p181
      %p183 = scmp.ne.s32.totalorder %s172, %s175
      %p184 = scmp.eq.s32.totalorder %s25, 3
      %p185 = por %p183, %p184
      %p186 = scmp.ne.s32.totalorder %s175, %s176
      %p187 = scmp.eq.s32.totalorder %s25, 0
      %p188 = por %p186, %p187
      %p189 = scmp.ne.s32.totalorder %s175, %s176
      %p190 = scmp.eq.s32.totalorder %s26, 3
      %p191 = por %p189, %p190
      %p193 = scmp.ne.s32.totalorder %s176, %s192
      %p194 = scmp.eq.s32.totalorder %s26, 0
      %p195 = por %p193, %p194
      %s196 = ssub.s32 %s27, %s39
      %p197 = scmp.eq.s32.totalorder %s196, 0
      %s199 = sadd.s32 %s198, 1
      %s200 = scalar_select %p197, %s198, %s199
      %p203 = pneg %p197
      %p204 = scmp.eq.s32.totalorder %s20, 3
      %p205 = por %p203, %p204
      %p206 = scmp.ne.s32.totalorder %s198, %s201
      %p207 = scmp.eq.s32.totalorder %s20, 0
      %p208 = por %p206, %p207
      %p209 = scmp.ne.s32.totalorder %s198, %s201
      %p210 = scmp.eq.s32.totalorder %s25, 3
      %p211 = por %p209, %p210
      %p212 = scmp.ne.s32.totalorder %s201, %s202
      %p213 = scmp.eq.s32.totalorder %s25, 0
      %p214 = por %p212, %p213
      %p215 = scmp.ne.s32.totalorder %s201, %s202
      %p216 = scmp.eq.s32.totalorder %s26, 3
      %p217 = por %p215, %p216
      %p219 = scmp.ne.s32.totalorder %s202, %s218
      %p220 = scmp.eq.s32.totalorder %s26, 0
      %p221 = por %p219, %p220
      %s222 = ssub.s32 %s28, %s35
      %s223 = ssub.s32 %s27, %s39
      %s224 = sor.u32 %s222, %s223
      %p225 = scmp.eq.s32.totalorder %s224, 0
      %s227 = sadd.s32 %s226, 1
      %s228 = scalar_select %p225, %s226, %s227
      %p231 = pneg %p225
      %p232 = scmp.eq.s32.totalorder %s20, 3
      %p233 = por %p231, %p232
      %p234 = scmp.ne.s32.totalorder %s226, %s229
      %p235 = scmp.eq.s32.totalorder %s20, 0
      %p236 = por %p234, %p235
      %p237 = scmp.ne.s32.totalorder %s226, %s229
      %p238 = scmp.eq.s32.totalorder %s25, 3
      %p239 = por %p237, %p238
      %p240 = scmp.ne.s32.totalorder %s229, %s230
      %p241 = scmp.eq.s32.totalorder %s25, 0
      %p242 = por %p240, %p241
      %p243 = scmp.ne.s32.totalorder %s229, %s230
      %p244 = scmp.eq.s32.totalorder %s26, 3
      %p245 = por %p243, %p244
      %p247 = scmp.ne.s32.totalorder %s230, %s246
      %p248 = scmp.eq.s32.totalorder %s26, 0
      %p249 = por %p247, %p248
      %p250 = scmp.le.s32.totalorder 1, %s20
      %p251 = scmp.lt.s32.totalorder %s20, 5
      %p252 = pnand %p250, %p251
      %p253 = pneg %p252
      // Predicated region
      $region9: #{tpu_custom_call.1} parent=5 // pred_check
        _
      $region10: #{tpu_custom_call.1} parent=5 // pred_check_branch
        %255 = sbr.rel (%p252) target = $region12
      $region11: #{tpu_custom_call.1} parent=5 // pred_region
        %s256 = ssub.s32 %s20, 1
      $region12: #{tpu_custom_call.1} parent=5 // pred_fallthru
        _
      %p257 = scmp.lt.s32.totalorder %s20, 4
      // Predicated region
      $region13: #{tpu_custom_call.1} parent=5 // pred_check
        %p258 = pneg %p257
      $region14: #{tpu_custom_call.1} parent=5 // pred_check_branch
        %260 = sbr.rel (%p258) target = $region16
      $region15: #{tpu_custom_call.1} parent=5 // pred_region
        // Predicated region
        $region17: #{tpu_custom_call.1} parent=15 // pred_check
          %p261 = pneg %p52
        $region18: #{tpu_custom_call.1} parent=15 // pred_check_branch
          %263 = sbr.rel (%p261) target = $region20
        $region19: #{tpu_custom_call.1} parent=15 // pred_region
          %p264 = scmp.lt.s32.totalorder %s27, 1
          %s265 = scalar_select %p264, %s27, 1
          %s266 = smul.addr %s265, 8
          %s267 = scalar_lea.vmem %s0, %s266
        $region20: #{tpu_custom_call.1} parent=15 // pred_fallthru
          _
        // Predicated region
        $region21: #{tpu_custom_call.1} parent=15 // pred_check
          %p268 = pneg %p78
        $region22: #{tpu_custom_call.1} parent=15 // pred_check_branch
          %270 = sbr.rel (%p268) target = $region24
        $region23: #{tpu_custom_call.1} parent=15 // pred_region
          %p271 = scmp.lt.s32.totalorder %s27, 1
          %s272 = scalar_select %p271, %s27, 1
          %s273 = scalar_lea.vmem %s1, %s272
        $region24: #{tpu_custom_call.1} parent=15 // pred_fallthru
          _
        // Predicated region
        $region25: #{tpu_custom_call.1} parent=15 // pred_check
          %p274 = pneg %p104
        $region26: #{tpu_custom_call.1} parent=15 // pred_check_branch
          %276 = sbr.rel (%p274) target = $region28
        $region27: #{tpu_custom_call.1} parent=15 // pred_region
          %p277 = scmp.lt.s32.totalorder %s28, 1
          %s278 = scalar_select %p277, %s28, 1
          %s279 = smul.addr %s278, 16
          %s280 = smul.addr %s279, 8
          %s281 = scalar_lea.vmem %s2, %s280
        $region28: #{tpu_custom_call.1} parent=15 // pred_fallthru
          _
        // Predicated region
        $region29: #{tpu_custom_call.1} parent=15 // pred_check
          %p282 = pneg %p130
        $region30: #{tpu_custom_call.1} parent=15 // pred_check_branch
          %284 = sbr.rel (%p282) target = $region32
        $region31: #{tpu_custom_call.1} parent=15 // pred_region
          %p285 = scmp.lt.s32.totalorder %s28, 1
          %s286 = scalar_select %p285, %s28, 1
          %s287 = smul.addr %s286, 4
          %s288 = smul.addr %s287, 8
          %s289 = scalar_lea.vmem %s3, %s288
        $region32: #{tpu_custom_call.1} parent=15 // pred_fallthru
          _
        // Predicated region
        $region33: #{tpu_custom_call.1} parent=15 // pred_check
          %p290 = pneg %p156
        $region34: #{tpu_custom_call.1} parent=15 // pred_check_branch
          %292 = sbr.rel (%p290) target = $region36
        $region35: #{tpu_custom_call.1} parent=15 // pred_region
          %p293 = scmp.lt.s32.totalorder %s28, 1
          %s294 = scalar_select %p293, %s28, 1
          %s295 = smul.addr %s294, 4
          %s296 = smul.addr %s295, 8
          %s297 = scalar_lea.vmem %s4, %s296
        $region36: #{tpu_custom_call.1} parent=15 // pred_fallthru
          _
        // Predicated region
        $region37: #{tpu_custom_call.1} parent=15 // pred_check
          %p298 = pneg %p182
        $region38: #{tpu_custom_call.1} parent=15 // pred_check_branch
          %300 = sbr.rel (%p298) target = $region40
        $region39: #{tpu_custom_call.1} parent=15 // pred_region
          %p301 = scmp.lt.s32.totalorder %s28, 1
          %s302 = scalar_select %p301, %s28, 1
          %s303 = smul.addr %s302, 8
          %s304 = smul.addr %s303, 8
          %s305 = scalar_lea.vmem %s5, %s304
        $region40: #{tpu_custom_call.1} parent=15 // pred_fallthru
          _
      $region16: #{tpu_custom_call.1} parent=5 // pred_fallthru
        _
      %p306 = scmp.le.s32.totalorder 1, %s20
      %p307 = scmp.lt.s32.totalorder %s20, 5
      %p308 = pnand %p306, %p307
      %p309 = pneg %p308
      // Predicated region
      $region41: #{tpu_custom_call.1} parent=5 // pred_check
        _
      $region42: #{tpu_custom_call.1} parent=5 // pred_check_branch
        %311 = sbr.rel (%p308) target = $region44
      $region43: #{tpu_custom_call.1} parent=5 // pred_region
        %s312 = ssub.s32 %s20, 1
        %p313 = scmp.lt.s32.totalorder %s29, 1
        %s314 = scalar_select %p313, %s29, 1
        %s315 = smul.addr %s314, 8
        %s316 = scalar_lea.vmem %s0, %s315
        %p317 = pneg %p58
        %p318 = pneg %p55
        %p319 = scmp.lt.s32.totalorder %s29, 1
        %s320 = scalar_select %p319, %s29, 1
        %s321 = scalar_lea.vmem %s1, %s320
        %p322 = pneg %p84
        %p323 = pneg %p81
        %p324 = scmp.lt.s32.totalorder %s30, 1
        %s325 = scalar_select %p324, %s30, 1
        %s326 = smul.addr %s325, 16
        %s327 = smul.addr %s326, 8
        %s328 = scalar_lea.vmem %s2, %s327
        %p329 = pneg %p110
        %p330 = pneg %p107
        %p331 = scmp.lt.s32.totalorder %s30, 1
        %s332 = scalar_select %p331, %s30, 1
        %s333 = smul.addr %s332, 4
        %s334 = smul.addr %s333, 8
        %s335 = scalar_lea.vmem %s3, %s334
        %p336 = pneg %p136
        %p337 = pneg %p133
        %p338 = scmp.lt.s32.totalorder %s30, 1
        %s339 = scalar_select %p338, %s30, 1
        %s340 = smul.addr %s339, 4
        %s341 = smul.addr %s340, 8
        %s342 = scalar_lea.vmem %s4, %s341
        %p343 = pneg %p162
        %p344 = pneg %p159
        %p345 = scmp.lt.s32.totalorder %s30, 1
        %s346 = scalar_select %p345, %s30, 1
        %s347 = smul.addr %s346, 8
        %s348 = smul.addr %s347, 8
        %s349 = scalar_lea.vmem %s5, %s348
        %p350 = pneg %p188
        %p351 = pneg %p185
        %p352 = pneg %p214
        %p353 = pneg %p211
        %s354 = sand.u32 %s201, 1
        %s355 = scalar_lea.sflag [#allocation4], %s354
        %s356 = sand.u32 %s201, 1
        %s357 = smul.addr %s356, 8
        %s358 = scalar_lea.vmem [#allocation3], %s357
        %p359 = pneg %p242
        %p360 = pneg %p239
        %s361 = sand.u32 %s229, 1
        %s362 = scalar_lea.sflag [#allocation6], %s361
        %s363 = sand.u32 %s229, 1
        %s364 = smul.addr %s363, 32
        %s365 = scalar_lea.vmem [#allocation5], %s364
        %p366 = scmp.lt.s32.totalorder %s29, 1
        %s367 = scalar_select %p366, %s29, 1
        %s368 = smul.addr %s367, 8
        %s369 = scalar_lea.vmem %s0, %s368
        %p370 = scmp.lt.s32.totalorder %s29, 1
        %s371 = scalar_select %p370, %s29, 1
        %s372 = scalar_lea.vmem %s1, %s371
        %p373 = scmp.lt.s32.totalorder %s30, 1
        %s374 = scalar_select %p373, %s30, 1
        %s375 = smul.addr %s374, 16
        %s376 = smul.addr %s375, 8
        %s377 = scalar_lea.vmem %s2, %s376
        %p378 = scmp.lt.s32.totalorder %s30, 1
        %s379 = scalar_select %p378, %s30, 1
        %s380 = smul.addr %s379, 4
        %s381 = smul.addr %s380, 8
        %s382 = scalar_lea.vmem %s3, %s381
        %p383 = scmp.lt.s32.totalorder %s30, 1
        %s384 = scalar_select %p383, %s30, 1
        %s385 = smul.addr %s384, 4
        %s386 = smul.addr %s385, 8
        %s387 = scalar_lea.vmem %s4, %s386
        %p388 = scmp.lt.s32.totalorder %s30, 1
        %s389 = scalar_select %p388, %s30, 1
        %s390 = smul.addr %s389, 8
        %s391 = smul.addr %s390, 8
        %s392 = scalar_lea.vmem %s5, %s391
        %s393 = smul.u32 4, %s29
        %p394 = scmp.eq.s32.totalorder %s30, 0
        // Predicated region
        $region45: #{tpu_custom_call.1} parent=43 // pred_check
          %p395 = pneg %p394
        $region46: #{tpu_custom_call.1} parent=43 // pred_check_branch
          %397 = sbr.rel (%p395) target = $region48
        $region47: #{tpu_custom_call.1} parent=43 // pred_region
          %v398 = vld [vmem:[%s369] sm:$0xff]
          %vm399 = vcmask 261120
          %400 = vst.msk [vmem:[#allocation2] sm:$0xff] %vm399, %v398
        $region48: #{tpu_custom_call.1} parent=43 // pred_fallthru
          _
        %v401 = vld [vmem:[#allocation2] sm:$0xff]
        %v402 = vld [vmem:[%s372] sm:$0x1]
        %vm403 = vcmp.gt.f32.partialorder %v402, 0.5
        %v404 = vsel %vm403, -1e+09, 0.0
        %v405 = vld [vmem:[%s377] sm:$0xff]
        %v406 = vld [vmem:[%s377 + $0x8] sm:$0xff]
        %v407 = vld [vmem:[%s377 + $0x10] sm:$0xff]
        %v408 = vld [vmem:[%s377 + $0x18] sm:$0xff]
        %v409 = vld [vmem:[%s377 + $0x20] sm:$0xff]
        %v410 = vld [vmem:[%s377 + $0x28] sm:$0xff]
        %v411 = vld [vmem:[%s377 + $0x30] sm:$0xff]
        %v412 = vld [vmem:[%s377 + $0x38] sm:$0xff]
        %v413 = vld [vmem:[%s377 + $0x40] sm:$0xff]
        %v414 = vld [vmem:[%s377 + $0x48] sm:$0xff]
        %v415 = vld [vmem:[%s377 + $0x50] sm:$0xff]
        %v416 = vld [vmem:[%s377 + $0x58] sm:$0xff]
        %v417 = vld [vmem:[%s377 + $0x60] sm:$0xff]
        %v418 = vld [vmem:[%s377 + $0x68] sm:$0xff]
        %v419 = vld [vmem:[%s377 + $0x70] sm:$0xff]
        %v420 = vld [vmem:[%s377 + $0x78] sm:$0xff]
        %vm421 = vcmask 261120
        %v423 = vsel %vm421, %v401, 0
        %425 = vmatprep.subr.mxu0 0.0
        %426 = vmatpush1.msra.mxu0 0.0
        %427 = vmatprep.subr.mxu0 0.0
        %428 = vmatpush1.msra.mxu0 0.0
        %429 = vmatprep.subr.mxu0 0.0
        %430 = vmatpush1.msra.mxu0 0.0
        %431 = vmatprep.subr.mxu0 0.0
        %432 = vmatpush1.msra.mxu0 0.0
        %433 = vmatprep.subr.mxu0 0.0
        %434 = vmatpush1.msra.mxu0 0.0
        %435 = vmatprep.subr.mxu0 0.0
        %436 = vmatpush1.msra.mxu0 0.0
        %437 = vmatprep.subr.mxu0 0.0
        %438 = vmatpush1.msra.mxu0 0.0
        %439 = vmatprep.subr.mxu0 0.0
        %440 = vmatpush1.msra.mxu0 0.0
        %441 = vmatprep.subr.mxu0 0.0
        %442 = vmatpush1.msra.mxu0 0.0
        %443 = vmatprep.subr.mxu0 0.0
        %444 = vmatpush1.msra.mxu0 0.0
        %445 = vmatprep.subr.mxu0 0.0
        %446 = vmatpush1.msra.mxu0 0.0
        %447 = vmatprep.subr.mxu0 0.0
        %448 = vmatpush1.msra.mxu0 0.0
        %449 = vmatprep.subr.mxu0 0.0
        %450 = vmatpush1.msra.mxu0 %v408
        %451 = vmatprep.subr.mxu0 0.0
        %452 = vmatpush1.msra.mxu0 %v407
        %453 = vmatprep.subr.mxu0 0.0
        %454 = vmatpush1.msra.mxu0 %v406
        %455 = vmatprep.subr.mxu0 0.0
        %456 = vmatpush1.msra.mxu0 %v405
        %457 = vmatprep.subr.mxu0 0.0
        %458 = vmatpush2.msra.mxu0 0.0
        %459 = vmatprep.subr.mxu0 0.0
        %460 = vmatpush2.msra.mxu0 0.0
        %461 = vmatprep.subr.mxu0 0.0
        %462 = vmatpush2.msra.mxu0 0.0
        %463 = vmatprep.subr.mxu0 0.0
        %464 = vmatpush2.msra.mxu0 0.0
        %465 = vmatprep.subr.mxu0 0.0
        %466 = vmatpush2.msra.mxu0 0.0
        %467 = vmatprep.subr.mxu0 0.0
        %468 = vmatpush2.msra.mxu0 0.0
        %469 = vmatprep.subr.mxu0 0.0
        %470 = vmatpush2.msra.mxu0 0.0
        %471 = vmatprep.subr.mxu0 0.0
        %472 = vmatpush2.msra.mxu0 0.0
        %473 = vmatprep.subr.mxu0 0.0
        %474 = vmatpush2.msra.mxu0 0.0
        %475 = vmatprep.subr.mxu0 0.0
        %476 = vmatpush2.msra.mxu0 0.0
        %477 = vmatprep.subr.mxu0 0.0
        %478 = vmatpush2.msra.mxu0 0.0
        %479 = vmatprep.subr.mxu0 0.0
        %480 = vmatpush2.msra.mxu0 0.0
        %481 = vmatprep.subr.mxu0 0.0
        %482 = vmatpush2.msra.mxu0 0.0
        %483 = vmatprep.subr.mxu0 0.0
        %484 = vmatpush2.msra.mxu0 0.0
        %485 = vmatprep.subr.mxu0 0.0
        %486 = vmatpush2.msra.mxu0 0.0
        %487 = vmatprep.subr.mxu0 0.0
        %488 = vmatpush2.msra.mxu0 0.0
        %489 = vmatprep.mubr.f32.mxu0 0.0
        %490 = vmatmul.mubr.f32.gmra.mxu0 %v423
        %v491 = vpop.f32.mrf.mxu0
        %v492 = vadd.f32 0.0, %v491
        %v493 = vpop.f32.mrf.mxu0
        %494 = vdwg.mxu0
        %495 = vmatprep.subr.mxu0 0.0
        %496 = vmatpush1.msra.mxu0 0.0
        %497 = vmatprep.subr.mxu0 0.0
        %498 = vmatpush1.msra.mxu0 0.0
        %499 = vmatprep.subr.mxu0 0.0
        %500 = vmatpush1.msra.mxu0 0.0
        %501 = vmatprep.subr.mxu0 0.0
        %502 = vmatpush1.msra.mxu0 0.0
        %503 = vmatprep.subr.mxu0 0.0
        %504 = vmatpush1.msra.mxu0 0.0
        %505 = vmatprep.subr.mxu0 0.0
        %506 = vmatpush1.msra.mxu0 0.0
        %507 = vmatprep.subr.mxu0 0.0
        %508 = vmatpush1.msra.mxu0 0.0
        %509 = vmatprep.subr.mxu0 0.0
        %510 = vmatpush1.msra.mxu0 0.0
        %511 = vmatprep.subr.mxu0 0.0
        %512 = vmatpush1.msra.mxu0 0.0
        %513 = vmatprep.subr.mxu0 0.0
        %514 = vmatpush1.msra.mxu0 0.0
        %515 = vmatprep.subr.mxu0 0.0
        %516 = vmatpush1.msra.mxu0 0.0
        %517 = vmatprep.subr.mxu0 0.0
        %518 = vmatpush1.msra.mxu0 0.0
        %519 = vmatprep.subr.mxu0 0.0
        %520 = vmatpush1.msra.mxu0 %v412
        %521 = vmatprep.subr.mxu0 0.0
        %522 = vmatpush1.msra.mxu0 %v411
        %523 = vmatprep.subr.mxu0 0.0
        %524 = vmatpush1.msra.mxu0 %v410
        %525 = vmatprep.subr.mxu0 0.0
        %526 = vmatpush1.msra.mxu0 %v409
        %527 = vmatprep.subr.mxu0 0.0
        %528 = vmatpush2.msra.mxu0 0.0
        %529 = vmatprep.subr.mxu0 0.0
        %530 = vmatpush2.msra.mxu0 0.0
        %531 = vmatprep.subr.mxu0 0.0
        %532 = vmatpush2.msra.mxu0 0.0
        %533 = vmatprep.subr.mxu0 0.0
        %534 = vmatpush2.msra.mxu0 0.0
        %535 = vmatprep.subr.mxu0 0.0
        %536 = vmatpush2.msra.mxu0 0.0
        %537 = vmatprep.subr.mxu0 0.0
        %538 = vmatpush2.msra.mxu0 0.0
        %539 = vmatprep.subr.mxu0 0.0
        %540 = vmatpush2.msra.mxu0 0.0
        %541 = vmatprep.subr.mxu0 0.0
        %542 = vmatpush2.msra.mxu0 0.0
        %543 = vmatprep.subr.mxu0 0.0
        %544 = vmatpush2.msra.mxu0 0.0
        %545 = vmatprep.subr.mxu0 0.0
        %546 = vmatpush2.msra.mxu0 0.0
        %547 = vmatprep.subr.mxu0 0.0
        %548 = vmatpush2.msra.mxu0 0.0
        %549 = vmatprep.subr.mxu0 0.0
        %550 = vmatpush2.msra.mxu0 0.0
        %551 = vmatprep.subr.mxu0 0.0
        %552 = vmatpush2.msra.mxu0 0.0
        %553 = vmatprep.subr.mxu0 0.0
        %554 = vmatpush2.msra.mxu0 0.0
        %555 = vmatprep.subr.mxu0 0.0
        %556 = vmatpush2.msra.mxu0 0.0
        %557 = vmatprep.subr.mxu0 0.0
        %558 = vmatpush2.msra.mxu0 0.0
        %559 = vmatprep.mubr.f32.mxu0 0.0
        %560 = vmatmul.mubr.f32.gmra.mxu0 %v423
        %v561 = vpop.f32.mrf.mxu0
        %v562 = vadd.f32 0.0, %v561
        %v563 = vpop.f32.mrf.mxu0
        %564 = vdwg.mxu0
        %565 = vmatprep.subr.mxu0 0.0
        %566 = vmatpush1.msra.mxu0 0.0
        %567 = vmatprep.subr.mxu0 0.0
        %568 = vmatpush1.msra.mxu0 0.0
        %569 = vmatprep.subr.mxu0 0.0
        %570 = vmatpush1.msra.mxu0 0.0
        %571 = vmatprep.subr.mxu0 0.0
        %572 = vmatpush1.msra.mxu0 0.0
        %573 = vmatprep.subr.mxu0 0.0
        %574 = vmatpush1.msra.mxu0 0.0
        %575 = vmatprep.subr.mxu0 0.0
        %576 = vmatpush1.msra.mxu0 0.0
        %577 = vmatprep.subr.mxu0 0.0
        %578 = vmatpush1.msra.mxu0 0.0
        %579 = vmatprep.subr.mxu0 0.0
        %580 = vmatpush1.msra.mxu0 0.0
        %581 = vmatprep.subr.mxu0 0.0
        %582 = vmatpush1.msra.mxu0 0.0
        %583 = vmatprep.subr.mxu0 0.0
        %584 = vmatpush1.msra.mxu0 0.0
        %585 = vmatprep.subr.mxu0 0.0
        %586 = vmatpush1.msra.mxu0 0.0
        %587 = vmatprep.subr.mxu0 0.0
        %588 = vmatpush1.msra.mxu0 0.0
        %589 = vmatprep.subr.mxu0 0.0
        %590 = vmatpush1.msra.mxu0 %v416
        %591 = vmatprep.subr.mxu0 0.0
        %592 = vmatpush1.msra.mxu0 %v415
        %593 = vmatprep.subr.mxu0 0.0
        %594 = vmatpush1.msra.mxu0 %v414
        %595 = vmatprep.subr.mxu0 0.0
        %596 = vmatpush1.msra.mxu0 %v413
        %597 = vmatprep.subr.mxu0 0.0
        %598 = vmatpush2.msra.mxu0 0.0
        %599 = vmatprep.subr.mxu0 0.0
        %600 = vmatpush2.msra.mxu0 0.0
        %601 = vmatprep.subr.mxu0 0.0
        %602 = vmatpush2.msra.mxu0 0.0
        %603 = vmatprep.subr.mxu0 0.0
        %604 = vmatpush2.msra.mxu0 0.0
        %605 = vmatprep.subr.mxu0 0.0
        %606 = vmatpush2.msra.mxu0 0.0
        %607 = vmatprep.subr.mxu0 0.0
        %608 = vmatpush2.msra.mxu0 0.0
        %609 = vmatprep.subr.mxu0 0.0
        %610 = vmatpush2.msra.mxu0 0.0
        %611 = vmatprep.subr.mxu0 0.0
        %612 = vmatpush2.msra.mxu0 0.0
        %613 = vmatprep.subr.mxu0 0.0
        %614 = vmatpush2.msra.mxu0 0.0
        %615 = vmatprep.subr.mxu0 0.0
        %616 = vmatpush2.msra.mxu0 0.0
        %617 = vmatprep.subr.mxu0 0.0
        %618 = vmatpush2.msra.mxu0 0.0
        %619 = vmatprep.subr.mxu0 0.0
        %620 = vmatpush2.msra.mxu0 0.0
        %621 = vmatprep.subr.mxu0 0.0
        %622 = vmatpush2.msra.mxu0 0.0
        %623 = vmatprep.subr.mxu0 0.0
        %624 = vmatpush2.msra.mxu0 0.0
        %625 = vmatprep.subr.mxu0 0.0
        %626 = vmatpush2.msra.mxu0 0.0
        %627 = vmatprep.subr.mxu0 0.0
        %628 = vmatpush2.msra.mxu0 0.0
        %629 = vmatprep.mubr.f32.mxu0 0.0
        %630 = vmatmul.mubr.f32.gmra.mxu0 %v423
        %v631 = vpop.f32.mrf.mxu0
        %v632 = vadd.f32 0.0, %v631
        %v633 = vpop.f32.mrf.mxu0
        %634 = vdwg.mxu0
        %635 = vmatprep.subr.mxu0 0.0
        %636 = vmatpush1.msra.mxu0 0.0
        %637 = vmatprep.subr.mxu0 0.0
        %638 = vmatpush1.msra.mxu0 0.0
        %639 = vmatprep.subr.mxu0 0.0
        %640 = vmatpush1.msra.mxu0 0.0
        %641 = vmatprep.subr.mxu0 0.0
        %642 = vmatpush1.msra.mxu0 0.0
        %643 = vmatprep.subr.mxu0 0.0
        %644 = vmatpush1.msra.mxu0 0.0
        %645 = vmatprep.subr.mxu0 0.0
        %646 = vmatpush1.msra.mxu0 0.0
        %647 = vmatprep.subr.mxu0 0.0
        %648 = vmatpush1.msra.mxu0 0.0
        %649 = vmatprep.subr.mxu0 0.0
        %650 = vmatpush1.msra.mxu0 0.0
        %651 = vmatprep.subr.mxu0 0.0
        %652 = vmatpush1.msra.mxu0 0.0
        %653 = vmatprep.subr.mxu0 0.0
        %654 = vmatpush1.msra.mxu0 0.0
        %655 = vmatprep.subr.mxu0 0.0
        %656 = vmatpush1.msra.mxu0 0.0
        %657 = vmatprep.subr.mxu0 0.0
        %658 = vmatpush1.msra.mxu0 0.0
        %659 = vmatprep.subr.mxu0 0.0
        %660 = vmatpush1.msra.mxu0 %v420
        %661 = vmatprep.subr.mxu0 0.0
        %662 = vmatpush1.msra.mxu0 %v419
        %663 = vmatprep.subr.mxu0 0.0
        %664 = vmatpush1.msra.mxu0 %v418
        %665 = vmatprep.subr.mxu0 0.0
        %666 = vmatpush1.msra.mxu0 %v417
        %667 = vmatprep.subr.mxu0 0.0
        %668 = vmatpush2.msra.mxu0 0.0
        %669 = vmatprep.subr.mxu0 0.0
        %670 = vmatpush2.msra.mxu0 0.0
        %671 = vmatprep.subr.mxu0 0.0
        %672 = vmatpush2.msra.mxu0 0.0
        %673 = vmatprep.subr.mxu0 0.0
        %674 = vmatpush2.msra.mxu0 0.0
        %675 = vmatprep.subr.mxu0 0.0
        %676 = vmatpush2.msra.mxu0 0.0
        %677 = vmatprep.subr.mxu0 0.0
        %678 = vmatpush2.msra.mxu0 0.0
        %679 = vmatprep.subr.mxu0 0.0
        %680 = vmatpush2.msra.mxu0 0.0
        %681 = vmatprep.subr.mxu0 0.0
        %682 = vmatpush2.msra.mxu0 0.0
        %683 = vmatprep.subr.mxu0 0.0
        %684 = vmatpush2.msra.mxu0 0.0
        %685 = vmatprep.subr.mxu0 0.0
        %686 = vmatpush2.msra.mxu0 0.0
        %687 = vmatprep.subr.mxu0 0.0
        %688 = vmatpush2.msra.mxu0 0.0
        %689 = vmatprep.subr.mxu0 0.0
        %690 = vmatpush2.msra.mxu0 0.0
        %691 = vmatprep.subr.mxu0 0.0
        %692 = vmatpush2.msra.mxu0 0.0
        %693 = vmatprep.subr.mxu0 0.0
        %694 = vmatpush2.msra.mxu0 0.0
        %695 = vmatprep.subr.mxu0 0.0
        %696 = vmatpush2.msra.mxu0 0.0
        %697 = vmatprep.subr.mxu0 0.0
        %698 = vmatpush2.msra.mxu0 0.0
        %699 = vmatprep.mubr.f32.mxu0 0.0
        %700 = vmatmul.mubr.f32.gmra.mxu0 %v423
        %v701 = vpop.f32.mrf.mxu0
        %v702 = vadd.f32 0.0, %v701
        %v703 = vpop.f32.mrf.mxu0
        %704 = vdwg.mxu0
        %706 = vrot.lane.b32.xlu0 %v492, 120
        %v707 = vpop.permute.xlu0 %706
        %vm708 = vcmask 64512
        %v709 = vsel %vm708, %v492, 0
        %v711 = vsel %vm708, %v707, 0
        %713 = vmatprep.subr.mxu0 0.0
        %714 = vmatpush1.xpose.msra.mxu0 0.0
        %715 = vmatprep.subr.mxu0 0.0
        %716 = vmatpush1.xpose.msra.mxu0 0.0
        %717 = vmatprep.subr.mxu0 0.0
        %718 = vmatpush1.xpose.msra.mxu0 0.0
        %719 = vmatprep.subr.mxu0 0.0
        %720 = vmatpush1.xpose.msra.mxu0 0.0
        %721 = vmatprep.subr.mxu0 0.0
        %722 = vmatpush1.xpose.msra.mxu0 0.0
        %723 = vmatprep.subr.mxu0 0.0
        %724 = vmatpush1.xpose.msra.mxu0 0.0
        %725 = vmatprep.subr.mxu0 0.0
        %726 = vmatpush1.xpose.msra.mxu0 0.0
        %727 = vmatprep.subr.mxu0 0.0
        %728 = vmatpush1.xpose.msra.mxu0 0.0
        %729 = vmatprep.subr.mxu0 0.0
        %730 = vmatpush1.xpose.msra.mxu0 0.0
        %731 = vmatprep.subr.mxu0 0.0
        %732 = vmatpush1.xpose.msra.mxu0 0.0
        %733 = vmatprep.subr.mxu0 0.0
        %734 = vmatpush1.xpose.msra.mxu0 0.0
        %735 = vmatprep.subr.mxu0 0.0
        %736 = vmatpush1.xpose.msra.mxu0 0.0
        %737 = vmatprep.subr.mxu0 0.0
        %738 = vmatpush1.xpose.msra.mxu0 0.0
        %739 = vmatprep.subr.mxu0 0.0
        %740 = vmatpush1.xpose.msra.mxu0 0.0
        %741 = vmatprep.subr.mxu0 0.0
        %742 = vmatpush1.xpose.msra.mxu0 0.0
        %743 = vmatprep.subr.mxu0 0.0
        %744 = vmatpush1.xpose.msra.mxu0 %v711
        %745 = vmatprep.subr.mxu0 0.0
        %746 = vmatpush2.xpose.msra.mxu0 0.0
        %747 = vmatprep.subr.mxu0 0.0
        %748 = vmatpush2.xpose.msra.mxu0 0.0
        %749 = vmatprep.subr.mxu0 0.0
        %750 = vmatpush2.xpose.msra.mxu0 0.0
        %751 = vmatprep.subr.mxu0 0.0
        %752 = vmatpush2.xpose.msra.mxu0 0.0
        %753 = vmatprep.subr.mxu0 0.0
        %754 = vmatpush2.xpose.msra.mxu0 0.0
        %755 = vmatprep.subr.mxu0 0.0
        %756 = vmatpush2.xpose.msra.mxu0 0.0
        %757 = vmatprep.subr.mxu0 0.0
        %758 = vmatpush2.xpose.msra.mxu0 0.0
        %759 = vmatprep.subr.mxu0 0.0
        %760 = vmatpush2.xpose.msra.mxu0 0.0
        %761 = vmatprep.subr.mxu0 0.0
        %762 = vmatpush2.xpose.msra.mxu0 0.0
        %763 = vmatprep.subr.mxu0 0.0
        %764 = vmatpush2.xpose.msra.mxu0 0.0
        %765 = vmatprep.subr.mxu0 0.0
        %766 = vmatpush2.xpose.msra.mxu0 0.0
        %767 = vmatprep.subr.mxu0 0.0
        %768 = vmatpush2.xpose.msra.mxu0 0.0
        %769 = vmatprep.subr.mxu0 0.0
        %770 = vmatpush2.xpose.msra.mxu0 0.0
        %771 = vmatprep.subr.mxu0 0.0
        %772 = vmatpush2.xpose.msra.mxu0 0.0
        %773 = vmatprep.subr.mxu0 0.0
        %774 = vmatpush2.xpose.msra.mxu0 0.0
        %775 = vmatprep.subr.mxu0 0.0
        %776 = vmatpush2.xpose.msra.mxu0 0.0
        %777 = vmatprep.mubr.f32.mxu0 0.0
        %778 = vmatmul.mubr.f32.gmra.mxu0 %v709
        %v779 = vpop.f32.mrf.mxu0
        %v780 = vadd.f32 0.0, %v779
        %v781 = vpop.f32.mrf.mxu0
        %782 = vdwg.mxu0
        %784 = vrot.lane.b32.xlu0 %v562, 120
        %v785 = vpop.permute.xlu0 %784
        %v786 = vsel %vm708, %v562, 0
        %v788 = vsel %vm708, %v785, 0
        %790 = vmatprep.subr.mxu0 0.0
        %791 = vmatpush1.xpose.msra.mxu0 0.0
        %792 = vmatprep.subr.mxu0 0.0
        %793 = vmatpush1.xpose.msra.mxu0 0.0
        %794 = vmatprep.subr.mxu0 0.0
        %795 = vmatpush1.xpose.msra.mxu0 0.0
        %796 = vmatprep.subr.mxu0 0.0
        %797 = vmatpush1.xpose.msra.mxu0 0.0
        %798 = vmatprep.subr.mxu0 0.0
        %799 = vmatpush1.xpose.msra.mxu0 0.0
        %800 = vmatprep.subr.mxu0 0.0
        %801 = vmatpush1.xpose.msra.mxu0 0.0
        %802 = vmatprep.subr.mxu0 0.0
        %803 = vmatpush1.xpose.msra.mxu0 0.0
        %804 = vmatprep.subr.mxu0 0.0
        %805 = vmatpush1.xpose.msra.mxu0 0.0
        %806 = vmatprep.subr.mxu0 0.0
        %807 = vmatpush1.xpose.msra.mxu0 0.0
        %808 = vmatprep.subr.mxu0 0.0
        %809 = vmatpush1.xpose.msra.mxu0 0.0
        %810 = vmatprep.subr.mxu0 0.0
        %811 = vmatpush1.xpose.msra.mxu0 0.0
        %812 = vmatprep.subr.mxu0 0.0
        %813 = vmatpush1.xpose.msra.mxu0 0.0
        %814 = vmatprep.subr.mxu0 0.0
        %815 = vmatpush1.xpose.msra.mxu0 0.0
        %816 = vmatprep.subr.mxu0 0.0
        %817 = vmatpush1.xpose.msra.mxu0 0.0
        %818 = vmatprep.subr.mxu0 0.0
        %819 = vmatpush1.xpose.msra.mxu0 0.0
        %820 = vmatprep.subr.mxu0 0.0
        %821 = vmatpush1.xpose.msra.mxu0 %v788
        %822 = vmatprep.subr.mxu0 0.0
        %823 = vmatpush2.xpose.msra.mxu0 0.0
        %824 = vmatprep.subr.mxu0 0.0
        %825 = vmatpush2.xpose.msra.mxu0 0.0
        %826 = vmatprep.subr.mxu0 0.0
        %827 = vmatpush2.xpose.msra.mxu0 0.0
        %828 = vmatprep.subr.mxu0 0.0
        %829 = vmatpush2.xpose.msra.mxu0 0.0
        %830 = vmatprep.subr.mxu0 0.0
        %831 = vmatpush2.xpose.msra.mxu0 0.0
        %832 = vmatprep.subr.mxu0 0.0
        %833 = vmatpush2.xpose.msra.mxu0 0.0
        %834 = vmatprep.subr.mxu0 0.0
        %835 = vmatpush2.xpose.msra.mxu0 0.0
        %836 = vmatprep.subr.mxu0 0.0
        %837 = vmatpush2.xpose.msra.mxu0 0.0
        %838 = vmatprep.subr.mxu0 0.0
        %839 = vmatpush2.xpose.msra.mxu0 0.0
        %840 = vmatprep.subr.mxu0 0.0
        %841 = vmatpush2.xpose.msra.mxu0 0.0
        %842 = vmatprep.subr.mxu0 0.0
        %843 = vmatpush2.xpose.msra.mxu0 0.0
        %844 = vmatprep.subr.mxu0 0.0
        %845 = vmatpush2.xpose.msra.mxu0 0.0
        %846 = vmatprep.subr.mxu0 0.0
        %847 = vmatpush2.xpose.msra.mxu0 0.0
        %848 = vmatprep.subr.mxu0 0.0
        %849 = vmatpush2.xpose.msra.mxu0 0.0
        %850 = vmatprep.subr.mxu0 0.0
        %851 = vmatpush2.xpose.msra.mxu0 0.0
        %852 = vmatprep.subr.mxu0 0.0
        %853 = vmatpush2.xpose.msra.mxu0 0.0
        %854 = vmatprep.mubr.f32.mxu0 0.0
        %855 = vmatmul.mubr.f32.gmra.mxu0 %v786
        %v856 = vpop.f32.mrf.mxu0
        %v857 = vadd.f32 0.0, %v856
        %v858 = vpop.f32.mrf.mxu0
        %859 = vdwg.mxu0
        %861 = vrot.lane.b32.xlu0 %v632, 120
        %v862 = vpop.permute.xlu0 %861
        %v863 = vsel %vm708, %v632, 0
        %v865 = vsel %vm708, %v862, 0
        %867 = vmatprep.subr.mxu0 0.0
        %868 = vmatpush1.xpose.msra.mxu0 0.0
        %869 = vmatprep.subr.mxu0 0.0
        %870 = vmatpush1.xpose.msra.mxu0 0.0
        %871 = vmatprep.subr.mxu0 0.0
        %872 = vmatpush1.xpose.msra.mxu0 0.0
        %873 = vmatprep.subr.mxu0 0.0
        %874 = vmatpush1.xpose.msra.mxu0 0.0
        %875 = vmatprep.subr.mxu0 0.0
        %876 = vmatpush1.xpose.msra.mxu0 0.0
        %877 = vmatprep.subr.mxu0 0.0
        %878 = vmatpush1.xpose.msra.mxu0 0.0
        %879 = vmatprep.subr.mxu0 0.0
        %880 = vmatpush1.xpose.msra.mxu0 0.0
        %881 = vmatprep.subr.mxu0 0.0
        %882 = vmatpush1.xpose.msra.mxu0 0.0
        %883 = vmatprep.subr.mxu0 0.0
        %884 = vmatpush1.xpose.msra.mxu0 0.0
        %885 = vmatprep.subr.mxu0 0.0
        %886 = vmatpush1.xpose.msra.mxu0 0.0
        %887 = vmatprep.subr.mxu0 0.0
        %888 = vmatpush1.xpose.msra.mxu0 0.0
        %889 = vmatprep.subr.mxu0 0.0
        %890 = vmatpush1.xpose.msra.mxu0 0.0
        %891 = vmatprep.subr.mxu0 0.0
        %892 = vmatpush1.xpose.msra.mxu0 0.0
        %893 = vmatprep.subr.mxu0 0.0
        %894 = vmatpush1.xpose.msra.mxu0 0.0
        %895 = vmatprep.subr.mxu0 0.0
        %896 = vmatpush1.xpose.msra.mxu0 0.0
        %897 = vmatprep.subr.mxu0 0.0
        %898 = vmatpush1.xpose.msra.mxu0 %v865
        %899 = vmatprep.subr.mxu0 0.0
        %900 = vmatpush2.xpose.msra.mxu0 0.0
        %901 = vmatprep.subr.mxu0 0.0
        %902 = vmatpush2.xpose.msra.mxu0 0.0
        %903 = vmatprep.subr.mxu0 0.0
        %904 = vmatpush2.xpose.msra.mxu0 0.0
        %905 = vmatprep.subr.mxu0 0.0
        %906 = vmatpush2.xpose.msra.mxu0 0.0
        %907 = vmatprep.subr.mxu0 0.0
        %908 = vmatpush2.xpose.msra.mxu0 0.0
        %909 = vmatprep.subr.mxu0 0.0
        %910 = vmatpush2.xpose.msra.mxu0 0.0
        %911 = vmatprep.subr.mxu0 0.0
        %912 = vmatpush2.xpose.msra.mxu0 0.0
        %913 = vmatprep.subr.mxu0 0.0
        %914 = vmatpush2.xpose.msra.mxu0 0.0
        %915 = vmatprep.subr.mxu0 0.0
        %916 = vmatpush2.xpose.msra.mxu0 0.0
        %917 = vmatprep.subr.mxu0 0.0
        %918 = vmatpush2.xpose.msra.mxu0 0.0
        %919 = vmatprep.subr.mxu0 0.0
        %920 = vmatpush2.xpose.msra.mxu0 0.0
        %921 = vmatprep.subr.mxu0 0.0
        %922 = vmatpush2.xpose.msra.mxu0 0.0
        %923 = vmatprep.subr.mxu0 0.0
        %924 = vmatpush2.xpose.msra.mxu0 0.0
        %925 = vmatprep.subr.mxu0 0.0
        %926 = vmatpush2.xpose.msra.mxu0 0.0
        %927 = vmatprep.subr.mxu0 0.0
        %928 = vmatpush2.xpose.msra.mxu0 0.0
        %929 = vmatprep.subr.mxu0 0.0
        %930 = vmatpush2.xpose.msra.mxu0 0.0
        %931 = vmatprep.mubr.f32.mxu0 0.0
        %932 = vmatmul.mubr.f32.gmra.mxu0 %v863
        %v933 = vpop.f32.mrf.mxu0
        %v934 = vadd.f32 0.0, %v933
        %v935 = vpop.f32.mrf.mxu0
        %936 = vdwg.mxu0
        %938 = vrot.lane.b32.xlu0 %v702, 120
        %v939 = vpop.permute.xlu0 %938
        %v940 = vsel %vm708, %v702, 0
        %v942 = vsel %vm708, %v939, 0
        %944 = vmatprep.subr.mxu0 0.0
        %945 = vmatpush1.xpose.msra.mxu0 0.0
        %946 = vmatprep.subr.mxu0 0.0
        %947 = vmatpush1.xpose.msra.mxu0 0.0
        %948 = vmatprep.subr.mxu0 0.0
        %949 = vmatpush1.xpose.msra.mxu0 0.0
        %950 = vmatprep.subr.mxu0 0.0
        %951 = vmatpush1.xpose.msra.mxu0 0.0
        %952 = vmatprep.subr.mxu0 0.0
        %953 = vmatpush1.xpose.msra.mxu0 0.0
        %954 = vmatprep.subr.mxu0 0.0
        %955 = vmatpush1.xpose.msra.mxu0 0.0
        %956 = vmatprep.subr.mxu0 0.0
        %957 = vmatpush1.xpose.msra.mxu0 0.0
        %958 = vmatprep.subr.mxu0 0.0
        %959 = vmatpush1.xpose.msra.mxu0 0.0
        %960 = vmatprep.subr.mxu0 0.0
        %961 = vmatpush1.xpose.msra.mxu0 0.0
        %962 = vmatprep.subr.mxu0 0.0
        %963 = vmatpush1.xpose.msra.mxu0 0.0
        %964 = vmatprep.subr.mxu0 0.0
        %965 = vmatpush1.xpose.msra.mxu0 0.0
        %966 = vmatprep.subr.mxu0 0.0
        %967 = vmatpush1.xpose.msra.mxu0 0.0
        %968 = vmatprep.subr.mxu0 0.0
        %969 = vmatpush1.xpose.msra.mxu0 0.0
        %970 = vmatprep.subr.mxu0 0.0
        %971 = vmatpush1.xpose.msra.mxu0 0.0
        %972 = vmatprep.subr.mxu0 0.0
        %973 = vmatpush1.xpose.msra.mxu0 0.0
        %974 = vmatprep.subr.mxu0 0.0
        %975 = vmatpush1.xpose.msra.mxu0 %v942
        %976 = vmatprep.subr.mxu0 0.0
        %977 = vmatpush2.xpose.msra.mxu0 0.0
        %978 = vmatprep.subr.mxu0 0.0
        %979 = vmatpush2.xpose.msra.mxu0 0.0
        %980 = vmatprep.subr.mxu0 0.0
        %981 = vmatpush2.xpose.msra.mxu0 0.0
        %982 = vmatprep.subr.mxu0 0.0
        %983 = vmatpush2.xpose.msra.mxu0 0.0
        %984 = vmatprep.subr.mxu0 0.0
        %985 = vmatpush2.xpose.msra.mxu0 0.0
        %986 = vmatprep.subr.mxu0 0.0
        %987 = vmatpush2.xpose.msra.mxu0 0.0
        %988 = vmatprep.subr.mxu0 0.0
        %989 = vmatpush2.xpose.msra.mxu0 0.0
        %990 = vmatprep.subr.mxu0 0.0
        %991 = vmatpush2.xpose.msra.mxu0 0.0
        %992 = vmatprep.subr.mxu0 0.0
        %993 = vmatpush2.xpose.msra.mxu0 0.0
        %994 = vmatprep.subr.mxu0 0.0
        %995 = vmatpush2.xpose.msra.mxu0 0.0
        %996 = vmatprep.subr.mxu0 0.0
        %997 = vmatpush2.xpose.msra.mxu0 0.0
        %998 = vmatprep.subr.mxu0 0.0
        %999 = vmatpush2.xpose.msra.mxu0 0.0
        %1000 = vmatprep.subr.mxu0 0.0
        %1001 = vmatpush2.xpose.msra.mxu0 0.0
        %1002 = vmatprep.subr.mxu0 0.0
        %1003 = vmatpush2.xpose.msra.mxu0 0.0
        %1004 = vmatprep.subr.mxu0 0.0
        %1005 = vmatpush2.xpose.msra.mxu0 0.0
        %1006 = vmatprep.subr.mxu0 0.0
        %1007 = vmatpush2.xpose.msra.mxu0 0.0
        %1008 = vmatprep.mubr.f32.mxu0 0.0
        %1009 = vmatmul.mubr.f32.gmra.mxu0 %v940
        %v1010 = vpop.f32.mrf.mxu0
        %v1011 = vadd.f32 0.0, %v1010
        %v1012 = vpop.f32.mrf.mxu0
        %1013 = vdwg.mxu0
        %v1014 = vmul.f32 %v780, 0.35355338
        %v1015 = vmul.f32 %v857, 0.35355338
        %v1016 = vmul.f32 %v934, 0.35355338
        %v1017 = vmul.f32 %v1011, 0.35355338
        %v1019 = vlaneseq
        %v1020 = vshrl.u32 %v1019, 7
        %v1021 = vsub.s32 0, %v1020
        %v1022 = vrot.slane %v404, %v1021
        %v1024 = vadd.f32 %v1014, %v1022
        %v1025 = vadd.f32 %v1015, %v1022
        %v1026 = vadd.f32 %v1016, %v1022
        %v1027 = vadd.f32 %v1017, %v1022
        %v1028 = vsel %vm708, %v1024, -inf
        %1029 = vmax.xlane.f32.xlu0 %v1028
        %v1030 = vpop.xlane.xlu0 %1029
        %v1031 = vsel %vm708, %v1025, -inf
        %1032 = vmax.xlane.f32.xlu0 %v1031
        %v1033 = vpop.xlane.xlu0 %1032
        %v1034 = vsel %vm708, %v1026, -inf
        %1035 = vmax.xlane.f32.xlu0 %v1034
        %v1036 = vpop.xlane.xlu0 %1035
        %v1037 = vsel %vm708, %v1027, -inf
        %1038 = vmax.xlane.f32.xlu0 %v1037
        %v1039 = vpop.xlane.xlu0 %1038
        %v1040 = vsub.f32 %v1024, %v1030
        %v1041 = vsub.f32 %v1025, %v1033
        %v1042 = vsub.f32 %v1026, %v1036
        %v1043 = vsub.f32 %v1027, %v1039
        %v1044 = vmul.f32 %v1040, 1.442695
        %v1045 = vpow.pop %v1044
        %v1046 = vmul.f32 %v1041, 1.442695
        %v1047 = vpow.pop %v1046
        %v1048 = vmul.f32 %v1042, 1.442695
        %v1049 = vpow.pop %v1048
        %v1050 = vmul.f32 %v1043, 1.442695
        %v1051 = vpow.pop %v1050
        %v1052 = vsel %vm708, %v1045, 0.0
        %1053 = vadd.xlane.f32.xlu0 %v1052
        %v1054 = vpop.xlane.xlu0 %1053
        %v1055 = vsel %vm708, %v1047, 0.0
        %1056 = vadd.xlane.f32.xlu0 %v1055
        %v1057 = vpop.xlane.xlu0 %1056
        %v1058 = vsel %vm708, %v1049, 0.0
        %1059 = vadd.xlane.f32.xlu0 %v1058
        %v1060 = vpop.xlane.xlu0 %1059
        %v1061 = vsel %vm708, %v1051, 0.0
        %1062 = vadd.xlane.f32.xlu0 %v1061
        %v1063 = vpop.xlane.xlu0 %1062
        %v1064 = vrcp.pop %v1054
        %v1065 = vrcp.pop %v1057
        %v1066 = vrcp.pop %v1060
        %v1067 = vrcp.pop %v1063
        %v1068 = vmul.f32 %v1045, %v1064
        %v1069 = vmul.f32 %v1047, %v1065
        %v1070 = vmul.f32 %v1049, %v1066
        %v1071 = vmul.f32 %v1051, %v1067
        %1072 = vst.msk [vmem:[%s365] sm:$0xff] %vm708, %v1068
        %1073 = vst.msk [vmem:[%s365 + $0x8] sm:$0xff] %vm708, %v1069
        %1074 = vst.msk [vmem:[%s365 + $0x10] sm:$0xff] %vm708, %v1070
        %1075 = vst.msk [vmem:[%s365 + $0x18] sm:$0xff] %vm708, %v1071
        %1076 = vrot.lane.b32.xlu0 %v492, 112
        %v1077 = vpop.permute.xlu0 %1076
        %v1080 = vsel %vm708, %v1068, 0
        %1082 = vmatprep.subr.mxu0 0.0
        %1083 = vmatpush1.msra.mxu0 0.0
        %1084 = vmatprep.subr.mxu0 0.0
        %1085 = vmatpush1.msra.mxu0 0.0
        %1086 = vmatprep.subr.mxu0 0.0
        %1087 = vmatpush1.msra.mxu0 0.0
        %1088 = vmatprep.subr.mxu0 0.0
        %1089 = vmatpush1.msra.mxu0 0.0
        %1090 = vmatprep.subr.mxu0 0.0
        %1091 = vmatpush1.msra.mxu0 0.0
        %1092 = vmatprep.subr.mxu0 0.0
        %1093 = vmatpush1.msra.mxu0 0.0
        %1094 = vmatprep.subr.mxu0 0.0
        %1095 = vmatpush1.msra.mxu0 0.0
        %1096 = vmatprep.subr.mxu0 0.0
        %1097 = vmatpush1.msra.mxu0 0.0
        %1098 = vmatprep.subr.mxu0 0.0
        %1099 = vmatpush1.msra.mxu0 0.0
        %1100 = vmatprep.subr.mxu0 0.0
        %1101 = vmatpush1.msra.mxu0 0.0
        %1102 = vmatprep.subr.mxu0 0.0
        %1103 = vmatpush1.msra.mxu0 0.0
        %1104 = vmatprep.subr.mxu0 0.0
        %1105 = vmatpush1.msra.mxu0 0.0
        %1106 = vmatprep.subr.mxu0 0.0
        %1107 = vmatpush1.msra.mxu0 0.0
        %1108 = vmatprep.subr.mxu0 0.0
        %1109 = vmatpush1.msra.mxu0 0.0
        %1110 = vmatprep.subr.mxu0 0.0
        %1111 = vmatpush1.msra.mxu0 0.0
        %1112 = vmatprep.subr.mxu0 0.0
        %1113 = vmatpush1.msra.mxu0 %v1077
        %1114 = vmatprep.subr.mxu0 0.0
        %1115 = vmatpush2.msra.mxu0 0.0
        %1116 = vmatprep.subr.mxu0 0.0
        %1117 = vmatpush2.msra.mxu0 0.0
        %1118 = vmatprep.subr.mxu0 0.0
        %1119 = vmatpush2.msra.mxu0 0.0
        %1120 = vmatprep.subr.mxu0 0.0
        %1121 = vmatpush2.msra.mxu0 0.0
        %1122 = vmatprep.subr.mxu0 0.0
        %1123 = vmatpush2.msra.mxu0 0.0
        %1124 = vmatprep.subr.mxu0 0.0
        %1125 = vmatpush2.msra.mxu0 0.0
        %1126 = vmatprep.subr.mxu0 0.0
        %1127 = vmatpush2.msra.mxu0 0.0
        %1128 = vmatprep.subr.mxu0 0.0
        %1129 = vmatpush2.msra.mxu0 0.0
        %1130 = vmatprep.subr.mxu0 0.0
        %1131 = vmatpush2.msra.mxu0 0.0
        %1132 = vmatprep.subr.mxu0 0.0
        %1133 = vmatpush2.msra.mxu0 0.0
        %1134 = vmatprep.subr.mxu0 0.0
        %1135 = vmatpush2.msra.mxu0 0.0
        %1136 = vmatprep.subr.mxu0 0.0
        %1137 = vmatpush2.msra.mxu0 0.0
        %1138 = vmatprep.subr.mxu0 0.0
        %1139 = vmatpush2.msra.mxu0 0.0
        %1140 = vmatprep.subr.mxu0 0.0
        %1141 = vmatpush2.msra.mxu0 0.0
        %1142 = vmatprep.subr.mxu0 0.0
        %1143 = vmatpush2.msra.mxu0 0.0
        %1144 = vmatprep.subr.mxu0 0.0
        %1145 = vmatpush2.msra.mxu0 0.0
        %1146 = vmatprep.mubr.f32.mxu0 0.0
        %1147 = vmatmul.mubr.f32.gmra.mxu0 %v1080
        %v1148 = vpop.f32.mrf.mxu0
        %v1149 = vadd.f32 0.0, %v1148
        %v1150 = vpop.f32.mrf.mxu0
        %1151 = vdwg.mxu0
        %1152 = vrot.lane.b32.xlu0 %v562, 112
        %v1153 = vpop.permute.xlu0 %1152
        %v1156 = vsel %vm708, %v1069, 0
        %1158 = vmatprep.subr.mxu0 0.0
        %1159 = vmatpush1.msra.mxu0 0.0
        %1160 = vmatprep.subr.mxu0 0.0
        %1161 = vmatpush1.msra.mxu0 0.0
        %1162 = vmatprep.subr.mxu0 0.0
        %1163 = vmatpush1.msra.mxu0 0.0
        %1164 = vmatprep.subr.mxu0 0.0
        %1165 = vmatpush1.msra.mxu0 0.0
        %1166 = vmatprep.subr.mxu0 0.0
        %1167 = vmatpush1.msra.mxu0 0.0
        %1168 = vmatprep.subr.mxu0 0.0
        %1169 = vmatpush1.msra.mxu0 0.0
        %1170 = vmatprep.subr.mxu0 0.0
        %1171 = vmatpush1.msra.mxu0 0.0
        %1172 = vmatprep.subr.mxu0 0.0
        %1173 = vmatpush1.msra.mxu0 0.0
        %1174 = vmatprep.subr.mxu0 0.0
        %1175 = vmatpush1.msra.mxu0 0.0
        %1176 = vmatprep.subr.mxu0 0.0
        %1177 = vmatpush1.msra.mxu0 0.0
        %1178 = vmatprep.subr.mxu0 0.0
        %1179 = vmatpush1.msra.mxu0 0.0
        %1180 = vmatprep.subr.mxu0 0.0
        %1181 = vmatpush1.msra.mxu0 0.0
        %1182 = vmatprep.subr.mxu0 0.0
        %1183 = vmatpush1.msra.mxu0 0.0
        %1184 = vmatprep.subr.mxu0 0.0
        %1185 = vmatpush1.msra.mxu0 0.0
        %1186 = vmatprep.subr.mxu0 0.0
        %1187 = vmatpush1.msra.mxu0 0.0
        %1188 = vmatprep.subr.mxu0 0.0
        %1189 = vmatpush1.msra.mxu0 %v1153
        %1190 = vmatprep.subr.mxu0 0.0
        %1191 = vmatpush2.msra.mxu0 0.0
        %1192 = vmatprep.subr.mxu0 0.0
        %1193 = vmatpush2.msra.mxu0 0.0
        %1194 = vmatprep.subr.mxu0 0.0
        %1195 = vmatpush2.msra.mxu0 0.0
        %1196 = vmatprep.subr.mxu0 0.0
        %1197 = vmatpush2.msra.mxu0 0.0
        %1198 = vmatprep.subr.mxu0 0.0
        %1199 = vmatpush2.msra.mxu0 0.0
        %1200 = vmatprep.subr.mxu0 0.0
        %1201 = vmatpush2.msra.mxu0 0.0
        %1202 = vmatprep.subr.mxu0 0.0
        %1203 = vmatpush2.msra.mxu0 0.0
        %1204 = vmatprep.subr.mxu0 0.0
        %1205 = vmatpush2.msra.mxu0 0.0
        %1206 = vmatprep.subr.mxu0 0.0
        %1207 = vmatpush2.msra.mxu0 0.0
        %1208 = vmatprep.subr.mxu0 0.0
        %1209 = vmatpush2.msra.mxu0 0.0
        %1210 = vmatprep.subr.mxu0 0.0
        %1211 = vmatpush2.msra.mxu0 0.0
        %1212 = vmatprep.subr.mxu0 0.0
        %1213 = vmatpush2.msra.mxu0 0.0
        %1214 = vmatprep.subr.mxu0 0.0
        %1215 = vmatpush2.msra.mxu0 0.0
        %1216 = vmatprep.subr.mxu0 0.0
        %1217 = vmatpush2.msra.mxu0 0.0
        %1218 = vmatprep.subr.mxu0 0.0
        %1219 = vmatpush2.msra.mxu0 0.0
        %1220 = vmatprep.subr.mxu0 0.0
        %1221 = vmatpush2.msra.mxu0 0.0
        %1222 = vmatprep.mubr.f32.mxu0 0.0
        %1223 = vmatmul.mubr.f32.gmra.mxu0 %v1156
        %v1224 = vpop.f32.mrf.mxu0
        %v1225 = vadd.f32 0.0, %v1224
        %v1226 = vpop.f32.mrf.mxu0
        %1227 = vdwg.mxu0
        %1228 = vrot.lane.b32.xlu0 %v632, 112
        %v1229 = vpop.permute.xlu0 %1228
        %v1232 = vsel %vm708, %v1070, 0
        %1234 = vmatprep.subr.mxu0 0.0
        %1235 = vmatpush1.msra.mxu0 0.0
        %1236 = vmatprep.subr.mxu0 0.0
        %1237 = vmatpush1.msra.mxu0 0.0
        %1238 = vmatprep.subr.mxu0 0.0
        %1239 = vmatpush1.msra.mxu0 0.0
        %1240 = vmatprep.subr.mxu0 0.0
        %1241 = vmatpush1.msra.mxu0 0.0
        %1242 = vmatprep.subr.mxu0 0.0
        %1243 = vmatpush1.msra.mxu0 0.0
        %1244 = vmatprep.subr.mxu0 0.0
        %1245 = vmatpush1.msra.mxu0 0.0
        %1246 = vmatprep.subr.mxu0 0.0
        %1247 = vmatpush1.msra.mxu0 0.0
        %1248 = vmatprep.subr.mxu0 0.0
        %1249 = vmatpush1.msra.mxu0 0.0
        %1250 = vmatprep.subr.mxu0 0.0
        %1251 = vmatpush1.msra.mxu0 0.0
        %1252 = vmatprep.subr.mxu0 0.0
        %1253 = vmatpush1.msra.mxu0 0.0
        %1254 = vmatprep.subr.mxu0 0.0
        %1255 = vmatpush1.msra.mxu0 0.0
        %1256 = vmatprep.subr.mxu0 0.0
        %1257 = vmatpush1.msra.mxu0 0.0
        %1258 = vmatprep.subr.mxu0 0.0
        %1259 = vmatpush1.msra.mxu0 0.0
        %1260 = vmatprep.subr.mxu0 0.0
        %1261 = vmatpush1.msra.mxu0 0.0
        %1262 = vmatprep.subr.mxu0 0.0
        %1263 = vmatpush1.msra.mxu0 0.0
        %1264 = vmatprep.subr.mxu0 0.0
        %1265 = vmatpush1.msra.mxu0 %v1229
        %1266 = vmatprep.subr.mxu0 0.0
        %1267 = vmatpush2.msra.mxu0 0.0
        %1268 = vmatprep.subr.mxu0 0.0
        %1269 = vmatpush2.msra.mxu0 0.0
        %1270 = vmatprep.subr.mxu0 0.0
        %1271 = vmatpush2.msra.mxu0 0.0
        %1272 = vmatprep.subr.mxu0 0.0
        %1273 = vmatpush2.msra.mxu0 0.0
        %1274 = vmatprep.subr.mxu0 0.0
        %1275 = vmatpush2.msra.mxu0 0.0
        %1276 = vmatprep.subr.mxu0 0.0
        %1277 = vmatpush2.msra.mxu0 0.0
        %1278 = vmatprep.subr.mxu0 0.0
        %1279 = vmatpush2.msra.mxu0 0.0
        %1280 = vmatprep.subr.mxu0 0.0
        %1281 = vmatpush2.msra.mxu0 0.0
        %1282 = vmatprep.subr.mxu0 0.0
        %1283 = vmatpush2.msra.mxu0 0.0
        %1284 = vmatprep.subr.mxu0 0.0
        %1285 = vmatpush2.msra.mxu0 0.0
        %1286 = vmatprep.subr.mxu0 0.0
        %1287 = vmatpush2.msra.mxu0 0.0
        %1288 = vmatprep.subr.mxu0 0.0
        %1289 = vmatpush2.msra.mxu0 0.0
        %1290 = vmatprep.subr.mxu0 0.0
        %1291 = vmatpush2.msra.mxu0 0.0
        %1292 = vmatprep.subr.mxu0 0.0
        %1293 = vmatpush2.msra.mxu0 0.0
        %1294 = vmatprep.subr.mxu0 0.0
        %1295 = vmatpush2.msra.mxu0 0.0
        %1296 = vmatprep.subr.mxu0 0.0
        %1297 = vmatpush2.msra.mxu0 0.0
        %1298 = vmatprep.mubr.f32.mxu0 0.0
        %1299 = vmatmul.mubr.f32.gmra.mxu0 %v1232
        %v1300 = vpop.f32.mrf.mxu0
        %v1301 = vadd.f32 0.0, %v1300
        %v1302 = vpop.f32.mrf.mxu0
        %1303 = vdwg.mxu0
        %1304 = vrot.lane.b32.xlu0 %v702, 112
        %v1305 = vpop.permute.xlu0 %1304
        %v1308 = vsel %vm708, %v1071, 0
        %1310 = vmatprep.subr.mxu0 0.0
        %1311 = vmatpush1.msra.mxu0 0.0
        %1312 = vmatprep.subr.mxu0 0.0
        %1313 = vmatpush1.msra.mxu0 0.0
        %1314 = vmatprep.subr.mxu0 0.0
        %1315 = vmatpush1.msra.mxu0 0.0
        %1316 = vmatprep.subr.mxu0 0.0
        %1317 = vmatpush1.msra.mxu0 0.0
        %1318 = vmatprep.subr.mxu0 0.0
        %1319 = vmatpush1.msra.mxu0 0.0
        %1320 = vmatprep.subr.mxu0 0.0
        %1321 = vmatpush1.msra.mxu0 0.0
        %1322 = vmatprep.subr.mxu0 0.0
        %1323 = vmatpush1.msra.mxu0 0.0
        %1324 = vmatprep.subr.mxu0 0.0
        %1325 = vmatpush1.msra.mxu0 0.0
        %1326 = vmatprep.subr.mxu0 0.0
        %1327 = vmatpush1.msra.mxu0 0.0
        %1328 = vmatprep.subr.mxu0 0.0
        %1329 = vmatpush1.msra.mxu0 0.0
        %1330 = vmatprep.subr.mxu0 0.0
        %1331 = vmatpush1.msra.mxu0 0.0
        %1332 = vmatprep.subr.mxu0 0.0
        %1333 = vmatpush1.msra.mxu0 0.0
        %1334 = vmatprep.subr.mxu0 0.0
        %1335 = vmatpush1.msra.mxu0 0.0
        %1336 = vmatprep.subr.mxu0 0.0
        %1337 = vmatpush1.msra.mxu0 0.0
        %1338 = vmatprep.subr.mxu0 0.0
        %1339 = vmatpush1.msra.mxu0 0.0
        %1340 = vmatprep.subr.mxu0 0.0
        %1341 = vmatpush1.msra.mxu0 %v1305
        %1342 = vmatprep.subr.mxu0 0.0
        %1343 = vmatpush2.msra.mxu0 0.0
        %1344 = vmatprep.subr.mxu0 0.0
        %1345 = vmatpush2.msra.mxu0 0.0
        %1346 = vmatprep.subr.mxu0 0.0
        %1347 = vmatpush2.msra.mxu0 0.0
        %1348 = vmatprep.subr.mxu0 0.0
        %1349 = vmatpush2.msra.mxu0 0.0
        %1350 = vmatprep.subr.mxu0 0.0
        %1351 = vmatpush2.msra.mxu0 0.0
        %1352 = vmatprep.subr.mxu0 0.0
        %1353 = vmatpush2.msra.mxu0 0.0
        %1354 = vmatprep.subr.mxu0 0.0
        %1355 = vmatpush2.msra.mxu0 0.0
        %1356 = vmatprep.subr.mxu0 0.0
        %1357 = vmatpush2.msra.mxu0 0.0
        %1358 = vmatprep.subr.mxu0 0.0
        %1359 = vmatpush2.msra.mxu0 0.0
        %1360 = vmatprep.subr.mxu0 0.0
        %1361 = vmatpush2.msra.mxu0 0.0
        %1362 = vmatprep.subr.mxu0 0.0
        %1363 = vmatpush2.msra.mxu0 0.0
        %1364 = vmatprep.subr.mxu0 0.0
        %1365 = vmatpush2.msra.mxu0 0.0
        %1366 = vmatprep.subr.mxu0 0.0
        %1367 = vmatpush2.msra.mxu0 0.0
        %1368 = vmatprep.subr.mxu0 0.0
        %1369 = vmatpush2.msra.mxu0 0.0
        %1370 = vmatprep.subr.mxu0 0.0
        %1371 = vmatpush2.msra.mxu0 0.0
        %1372 = vmatprep.subr.mxu0 0.0
        %1373 = vmatpush2.msra.mxu0 0.0
        %1374 = vmatprep.mubr.f32.mxu0 0.0
        %1375 = vmatmul.mubr.f32.gmra.mxu0 %v1308
        %v1376 = vpop.f32.mrf.mxu0
        %v1377 = vadd.f32 0.0, %v1376
        %v1378 = vpop.f32.mrf.mxu0
        %1379 = vdwg.mxu0
        %v1380 = vld [vmem:[%s382] sm:$0xff]
        %v1381 = vld [vmem:[%s382 + $0x8] sm:$0xff]
        %v1382 = vld [vmem:[%s382 + $0x10] sm:$0xff]
        %v1383 = vld [vmem:[%s382 + $0x18] sm:$0xff]
        %v1385 = vsel %vm708, %v1149, 0
        %1387 = vmatprep.subr.mxu0 0.0
        %1388 = vmatpush1.msra.mxu0 0.0
        %1389 = vmatprep.subr.mxu0 0.0
        %1390 = vmatpush1.msra.mxu0 0.0
        %1391 = vmatprep.subr.mxu0 0.0
        %1392 = vmatpush1.msra.mxu0 0.0
        %1393 = vmatprep.subr.mxu0 0.0
        %1394 = vmatpush1.msra.mxu0 0.0
        %1395 = vmatprep.subr.mxu0 0.0
        %1396 = vmatpush1.msra.mxu0 0.0
        %1397 = vmatprep.subr.mxu0 0.0
        %1398 = vmatpush1.msra.mxu0 0.0
        %1399 = vmatprep.subr.mxu0 0.0
        %1400 = vmatpush1.msra.mxu0 0.0
        %1401 = vmatprep.subr.mxu0 0.0
        %1402 = vmatpush1.msra.mxu0 0.0
        %1403 = vmatprep.subr.mxu0 0.0
        %1404 = vmatpush1.msra.mxu0 0.0
        %1405 = vmatprep.subr.mxu0 0.0
        %1406 = vmatpush1.msra.mxu0 0.0
        %1407 = vmatprep.subr.mxu0 0.0
        %1408 = vmatpush1.msra.mxu0 0.0
        %1409 = vmatprep.subr.mxu0 0.0
        %1410 = vmatpush1.msra.mxu0 0.0
        %1411 = vmatprep.subr.mxu0 0.0
        %1412 = vmatpush1.msra.mxu0 0.0
        %1413 = vmatprep.subr.mxu0 0.0
        %1414 = vmatpush1.msra.mxu0 0.0
        %1415 = vmatprep.subr.mxu0 0.0
        %1416 = vmatpush1.msra.mxu0 0.0
        %1417 = vmatprep.subr.mxu0 0.0
        %1418 = vmatpush1.msra.mxu0 %v1380
        %1419 = vmatprep.subr.mxu0 0.0
        %1420 = vmatpush2.msra.mxu0 0.0
        %1421 = vmatprep.subr.mxu0 0.0
        %1422 = vmatpush2.msra.mxu0 0.0
        %1423 = vmatprep.subr.mxu0 0.0
        %1424 = vmatpush2.msra.mxu0 0.0
        %1425 = vmatprep.subr.mxu0 0.0
        %1426 = vmatpush2.msra.mxu0 0.0
        %1427 = vmatprep.subr.mxu0 0.0
        %1428 = vmatpush2.msra.mxu0 0.0
        %1429 = vmatprep.subr.mxu0 0.0
        %1430 = vmatpush2.msra.mxu0 0.0
        %1431 = vmatprep.subr.mxu0 0.0
        %1432 = vmatpush2.msra.mxu0 0.0
        %1433 = vmatprep.subr.mxu0 0.0
        %1434 = vmatpush2.msra.mxu0 0.0
        %1435 = vmatprep.subr.mxu0 0.0
        %1436 = vmatpush2.msra.mxu0 0.0
        %1437 = vmatprep.subr.mxu0 0.0
        %1438 = vmatpush2.msra.mxu0 0.0
        %1439 = vmatprep.subr.mxu0 0.0
        %1440 = vmatpush2.msra.mxu0 0.0
        %1441 = vmatprep.subr.mxu0 0.0
        %1442 = vmatpush2.msra.mxu0 0.0
        %1443 = vmatprep.subr.mxu0 0.0
        %1444 = vmatpush2.msra.mxu0 0.0
        %1445 = vmatprep.subr.mxu0 0.0
        %1446 = vmatpush2.msra.mxu0 0.0
        %1447 = vmatprep.subr.mxu0 0.0
        %1448 = vmatpush2.msra.mxu0 0.0
        %1449 = vmatprep.subr.mxu0 0.0
        %1450 = vmatpush2.msra.mxu0 0.0
        %1451 = vmatprep.mubr.f32.mxu0 0.0
        %1452 = vmatmul.mubr.f32.gmra.mxu0 %v1385
        %v1453 = vpop.f32.mrf.mxu0
        %v1454 = vadd.f32 0.0, %v1453
        %v1455 = vpop.f32.mrf.mxu0
        %1456 = vdwg.mxu0
        %v1458 = vsel %vm708, %v1225, 0
        %1460 = vmatprep.subr.mxu0 0.0
        %1461 = vmatpush1.msra.mxu0 0.0
        %1462 = vmatprep.subr.mxu0 0.0
        %1463 = vmatpush1.msra.mxu0 0.0
        %1464 = vmatprep.subr.mxu0 0.0
        %1465 = vmatpush1.msra.mxu0 0.0
        %1466 = vmatprep.subr.mxu0 0.0
        %1467 = vmatpush1.msra.mxu0 0.0
        %1468 = vmatprep.subr.mxu0 0.0
        %1469 = vmatpush1.msra.mxu0 0.0
        %1470 = vmatprep.subr.mxu0 0.0
        %1471 = vmatpush1.msra.mxu0 0.0
        %1472 = vmatprep.subr.mxu0 0.0
        %1473 = vmatpush1.msra.mxu0 0.0
        %1474 = vmatprep.subr.mxu0 0.0
        %1475 = vmatpush1.msra.mxu0 0.0
        %1476 = vmatprep.subr.mxu0 0.0
        %1477 = vmatpush1.msra.mxu0 0.0
        %1478 = vmatprep.subr.mxu0 0.0
        %1479 = vmatpush1.msra.mxu0 0.0
        %1480 = vmatprep.subr.mxu0 0.0
        %1481 = vmatpush1.msra.mxu0 0.0
        %1482 = vmatprep.subr.mxu0 0.0
        %1483 = vmatpush1.msra.mxu0 0.0
        %1484 = vmatprep.subr.mxu0 0.0
        %1485 = vmatpush1.msra.mxu0 0.0
        %1486 = vmatprep.subr.mxu0 0.0
        %1487 = vmatpush1.msra.mxu0 0.0
        %1488 = vmatprep.subr.mxu0 0.0
        %1489 = vmatpush1.msra.mxu0 0.0
        %1490 = vmatprep.subr.mxu0 0.0
        %1491 = vmatpush1.msra.mxu0 %v1381
        %1492 = vmatprep.subr.mxu0 0.0
        %1493 = vmatpush2.msra.mxu0 0.0
        %1494 = vmatprep.subr.mxu0 0.0
        %1495 = vmatpush2.msra.mxu0 0.0
        %1496 = vmatprep.subr.mxu0 0.0
        %1497 = vmatpush2.msra.mxu0 0.0
        %1498 = vmatprep.subr.mxu0 0.0
        %1499 = vmatpush2.msra.mxu0 0.0
        %1500 = vmatprep.subr.mxu0 0.0
        %1501 = vmatpush2.msra.mxu0 0.0
        %1502 = vmatprep.subr.mxu0 0.0
        %1503 = vmatpush2.msra.mxu0 0.0
        %1504 = vmatprep.subr.mxu0 0.0
        %1505 = vmatpush2.msra.mxu0 0.0
        %1506 = vmatprep.subr.mxu0 0.0
        %1507 = vmatpush2.msra.mxu0 0.0
        %1508 = vmatprep.subr.mxu0 0.0
        %1509 = vmatpush2.msra.mxu0 0.0
        %1510 = vmatprep.subr.mxu0 0.0
        %1511 = vmatpush2.msra.mxu0 0.0
        %1512 = vmatprep.subr.mxu0 0.0
        %1513 = vmatpush2.msra.mxu0 0.0
        %1514 = vmatprep.subr.mxu0 0.0
        %1515 = vmatpush2.msra.mxu0 0.0
        %1516 = vmatprep.subr.mxu0 0.0
        %1517 = vmatpush2.msra.mxu0 0.0
        %1518 = vmatprep.subr.mxu0 0.0
        %1519 = vmatpush2.msra.mxu0 0.0
        %1520 = vmatprep.subr.mxu0 0.0
        %1521 = vmatpush2.msra.mxu0 0.0
        %1522 = vmatprep.subr.mxu0 0.0
        %1523 = vmatpush2.msra.mxu0 0.0
        %1524 = vmatprep.mubr.f32.mxu0 0.0
        %1525 = vmatmul.mubr.f32.gmra.mxu0 %v1458
        %v1526 = vpop.f32.mrf.mxu0
        %v1527 = vadd.f32 0.0, %v1526
        %v1528 = vpop.f32.mrf.mxu0
        %1529 = vdwg.mxu0
        %v1531 = vsel %vm708, %v1301, 0
        %1533 = vmatprep.subr.mxu0 0.0
        %1534 = vmatpush1.msra.mxu0 0.0
        %1535 = vmatprep.subr.mxu0 0.0
        %1536 = vmatpush1.msra.mxu0 0.0
        %1537 = vmatprep.subr.mxu0 0.0
        %1538 = vmatpush1.msra.mxu0 0.0
        %1539 = vmatprep.subr.mxu0 0.0
        %1540 = vmatpush1.msra.mxu0 0.0
        %1541 = vmatprep.subr.mxu0 0.0
        %1542 = vmatpush1.msra.mxu0 0.0
        %1543 = vmatprep.subr.mxu0 0.0
        %1544 = vmatpush1.msra.mxu0 0.0
        %1545 = vmatprep.subr.mxu0 0.0
        %1546 = vmatpush1.msra.mxu0 0.0
        %1547 = vmatprep.subr.mxu0 0.0
        %1548 = vmatpush1.msra.mxu0 0.0
        %1549 = vmatprep.subr.mxu0 0.0
        %1550 = vmatpush1.msra.mxu0 0.0
        %1551 = vmatprep.subr.mxu0 0.0
        %1552 = vmatpush1.msra.mxu0 0.0
        %1553 = vmatprep.subr.mxu0 0.0
        %1554 = vmatpush1.msra.mxu0 0.0
        %1555 = vmatprep.subr.mxu0 0.0
        %1556 = vmatpush1.msra.mxu0 0.0
        %1557 = vmatprep.subr.mxu0 0.0
        %1558 = vmatpush1.msra.mxu0 0.0
        %1559 = vmatprep.subr.mxu0 0.0
        %1560 = vmatpush1.msra.mxu0 0.0
        %1561 = vmatprep.subr.mxu0 0.0
        %1562 = vmatpush1.msra.mxu0 0.0
        %1563 = vmatprep.subr.mxu0 0.0
        %1564 = vmatpush1.msra.mxu0 %v1382
        %1565 = vmatprep.subr.mxu0 0.0
        %1566 = vmatpush2.msra.mxu0 0.0
        %1567 = vmatprep.subr.mxu0 0.0
        %1568 = vmatpush2.msra.mxu0 0.0
        %1569 = vmatprep.subr.mxu0 0.0
        %1570 = vmatpush2.msra.mxu0 0.0
        %1571 = vmatprep.subr.mxu0 0.0
        %1572 = vmatpush2.msra.mxu0 0.0
        %1573 = vmatprep.subr.mxu0 0.0
        %1574 = vmatpush2.msra.mxu0 0.0
        %1575 = vmatprep.subr.mxu0 0.0
        %1576 = vmatpush2.msra.mxu0 0.0
        %1577 = vmatprep.subr.mxu0 0.0
        %1578 = vmatpush2.msra.mxu0 0.0
        %1579 = vmatprep.subr.mxu0 0.0
        %1580 = vmatpush2.msra.mxu0 0.0
        %1581 = vmatprep.subr.mxu0 0.0
        %1582 = vmatpush2.msra.mxu0 0.0
        %1583 = vmatprep.subr.mxu0 0.0
        %1584 = vmatpush2.msra.mxu0 0.0
        %1585 = vmatprep.subr.mxu0 0.0
        %1586 = vmatpush2.msra.mxu0 0.0
        %1587 = vmatprep.subr.mxu0 0.0
        %1588 = vmatpush2.msra.mxu0 0.0
        %1589 = vmatprep.subr.mxu0 0.0
        %1590 = vmatpush2.msra.mxu0 0.0
        %1591 = vmatprep.subr.mxu0 0.0
        %1592 = vmatpush2.msra.mxu0 0.0
        %1593 = vmatprep.subr.mxu0 0.0
        %1594 = vmatpush2.msra.mxu0 0.0
        %1595 = vmatprep.subr.mxu0 0.0
        %1596 = vmatpush2.msra.mxu0 0.0
        %1597 = vmatprep.mubr.f32.mxu0 0.0
        %1598 = vmatmul.mubr.f32.gmra.mxu0 %v1531
        %v1599 = vpop.f32.mrf.mxu0
        %v1600 = vadd.f32 0.0, %v1599
        %v1601 = vpop.f32.mrf.mxu0
        %1602 = vdwg.mxu0
        %v1604 = vsel %vm708, %v1377, 0
        %1606 = vmatprep.subr.mxu0 0.0
        %1607 = vmatpush1.msra.mxu0 0.0
        %1608 = vmatprep.subr.mxu0 0.0
        %1609 = vmatpush1.msra.mxu0 0.0
        %1610 = vmatprep.subr.mxu0 0.0
        %1611 = vmatpush1.msra.mxu0 0.0
        %1612 = vmatprep.subr.mxu0 0.0
        %1613 = vmatpush1.msra.mxu0 0.0
        %1614 = vmatprep.subr.mxu0 0.0
        %1615 = vmatpush1.msra.mxu0 0.0
        %1616 = vmatprep.subr.mxu0 0.0
        %1617 = vmatpush1.msra.mxu0 0.0
        %1618 = vmatprep.subr.mxu0 0.0
        %1619 = vmatpush1.msra.mxu0 0.0
        %1620 = vmatprep.subr.mxu0 0.0
        %1621 = vmatpush1.msra.mxu0 0.0
        %1622 = vmatprep.subr.mxu0 0.0
        %1623 = vmatpush1.msra.mxu0 0.0
        %1624 = vmatprep.subr.mxu0 0.0
        %1625 = vmatpush1.msra.mxu0 0.0
        %1626 = vmatprep.subr.mxu0 0.0
        %1627 = vmatpush1.msra.mxu0 0.0
        %1628 = vmatprep.subr.mxu0 0.0
        %1629 = vmatpush1.msra.mxu0 0.0
        %1630 = vmatprep.subr.mxu0 0.0
        %1631 = vmatpush1.msra.mxu0 0.0
        %1632 = vmatprep.subr.mxu0 0.0
        %1633 = vmatpush1.msra.mxu0 0.0
        %1634 = vmatprep.subr.mxu0 0.0
        %1635 = vmatpush1.msra.mxu0 0.0
        %1636 = vmatprep.subr.mxu0 0.0
        %1637 = vmatpush1.msra.mxu0 %v1383
        %1638 = vmatprep.subr.mxu0 0.0
        %1639 = vmatpush2.msra.mxu0 0.0
        %1640 = vmatprep.subr.mxu0 0.0
        %1641 = vmatpush2.msra.mxu0 0.0
        %1642 = vmatprep.subr.mxu0 0.0
        %1643 = vmatpush2.msra.mxu0 0.0
        %1644 = vmatprep.subr.mxu0 0.0
        %1645 = vmatpush2.msra.mxu0 0.0
        %1646 = vmatprep.subr.mxu0 0.0
        %1647 = vmatpush2.msra.mxu0 0.0
        %1648 = vmatprep.subr.mxu0 0.0
        %1649 = vmatpush2.msra.mxu0 0.0
        %1650 = vmatprep.subr.mxu0 0.0
        %1651 = vmatpush2.msra.mxu0 0.0
        %1652 = vmatprep.subr.mxu0 0.0
        %1653 = vmatpush2.msra.mxu0 0.0
        %1654 = vmatprep.subr.mxu0 0.0
        %1655 = vmatpush2.msra.mxu0 0.0
        %1656 = vmatprep.subr.mxu0 0.0
        %1657 = vmatpush2.msra.mxu0 0.0
        %1658 = vmatprep.subr.mxu0 0.0
        %1659 = vmatpush2.msra.mxu0 0.0
        %1660 = vmatprep.subr.mxu0 0.0
        %1661 = vmatpush2.msra.mxu0 0.0
        %1662 = vmatprep.subr.mxu0 0.0
        %1663 = vmatpush2.msra.mxu0 0.0
        %1664 = vmatprep.subr.mxu0 0.0
        %1665 = vmatpush2.msra.mxu0 0.0
        %1666 = vmatprep.subr.mxu0 0.0
        %1667 = vmatpush2.msra.mxu0 0.0
        %1668 = vmatprep.subr.mxu0 0.0
        %1669 = vmatpush2.msra.mxu0 0.0
        %1670 = vmatprep.mubr.f32.mxu0 0.0
        %1671 = vmatmul.mubr.f32.gmra.mxu0 %v1604
        %v1672 = vpop.f32.mrf.mxu0
        %v1673 = vadd.f32 0.0, %v1672
        %v1674 = vpop.f32.mrf.mxu0
        %1675 = vdwg.mxu0
        %v1676 = vsel %vm421, %v1454, 0.0
        %v1677 = vsel %vm421, %v1527, 0.0
        %v1678 = vadd.f32 %v1676, %v1677
        %v1679 = vsel %vm421, %v1600, 0.0
        %v1680 = vadd.f32 %v1678, %v1679
        %v1681 = vsel %vm421, %v1673, 0.0
        %v1682 = vadd.f32 %v1680, %v1681
        %v1683 = vadd.f32 %v1682, %v401
        %v1684 = vsel %vm421, %v1683, 0.0
        %1685 = vadd.xlane.f32.xlu0 %v1684
        %v1686 = vpop.xlane.xlu0 %1685
        %v1687 = vrcp.pop 32.0
        %v1688 = vmul.f32 %v1686, %v1687
        %v1689 = vsub.f32 %v1683, %v1688
        %v1690 = vmul.f32 %v1689, %v1689
        %v1691 = vsel %vm421, %v1690, 0.0
        %1692 = vadd.xlane.f32.xlu0 %v1691
        %v1693 = vpop.xlane.xlu0 %1692
        %v1694 = vmul.f32 %v1693, %v1687
        %v1695 = vadd.f32 %v1694, 1e-05
        %v1696 = vrsqrt.pop %v1695
        %v1697 = vmul.f32 %v1689, %v1696
        %v1698 = vld [vmem:[%s387] sm:$0xff]
        %v1699 = vld [vmem:[%s387 + $0x8] sm:$0xff]
        %v1700 = vld [vmem:[%s387 + $0x10] sm:$0xff]
        %v1701 = vld [vmem:[%s387 + $0x18] sm:$0xff]
        %v1703 = vsel %vm421, %v1697, 0
        %1705 = vmatprep.subr.mxu0 0.0
        %1706 = vmatpush1.msra.mxu0 0.0
        %1707 = vmatprep.subr.mxu0 0.0
        %1708 = vmatpush1.msra.mxu0 0.0
        %1709 = vmatprep.subr.mxu0 0.0
        %1710 = vmatpush1.msra.mxu0 0.0
        %1711 = vmatprep.subr.mxu0 0.0
        %1712 = vmatpush1.msra.mxu0 0.0
        %1713 = vmatprep.subr.mxu0 0.0
        %1714 = vmatpush1.msra.mxu0 0.0
        %1715 = vmatprep.subr.mxu0 0.0
        %1716 = vmatpush1.msra.mxu0 0.0
        %1717 = vmatprep.subr.mxu0 0.0
        %1718 = vmatpush1.msra.mxu0 0.0
        %1719 = vmatprep.subr.mxu0 0.0
        %1720 = vmatpush1.msra.mxu0 0.0
        %1721 = vmatprep.subr.mxu0 0.0
        %1722 = vmatpush1.msra.mxu0 0.0
        %1723 = vmatprep.subr.mxu0 0.0
        %1724 = vmatpush1.msra.mxu0 0.0
        %1725 = vmatprep.subr.mxu0 0.0
        %1726 = vmatpush1.msra.mxu0 0.0
        %1727 = vmatprep.subr.mxu0 0.0
        %1728 = vmatpush1.msra.mxu0 0.0
        %1729 = vmatprep.subr.mxu0 0.0
        %1730 = vmatpush1.msra.mxu0 %v1701
        %1731 = vmatprep.subr.mxu0 0.0
        %1732 = vmatpush1.msra.mxu0 %v1700
        %1733 = vmatprep.subr.mxu0 0.0
        %1734 = vmatpush1.msra.mxu0 %v1699
        %1735 = vmatprep.subr.mxu0 0.0
        %1736 = vmatpush1.msra.mxu0 %v1698
        %1737 = vmatprep.subr.mxu0 0.0
        %1738 = vmatpush2.msra.mxu0 0.0
        %1739 = vmatprep.subr.mxu0 0.0
        %1740 = vmatpush2.msra.mxu0 0.0
        %1741 = vmatprep.subr.mxu0 0.0
        %1742 = vmatpush2.msra.mxu0 0.0
        %1743 = vmatprep.subr.mxu0 0.0
        %1744 = vmatpush2.msra.mxu0 0.0
        %1745 = vmatprep.subr.mxu0 0.0
        %1746 = vmatpush2.msra.mxu0 0.0
        %1747 = vmatprep.subr.mxu0 0.0
        %1748 = vmatpush2.msra.mxu0 0.0
        %1749 = vmatprep.subr.mxu0 0.0
        %1750 = vmatpush2.msra.mxu0 0.0
        %1751 = vmatprep.subr.mxu0 0.0
        %1752 = vmatpush2.msra.mxu0 0.0
        %1753 = vmatprep.subr.mxu0 0.0
        %1754 = vmatpush2.msra.mxu0 0.0
        %1755 = vmatprep.subr.mxu0 0.0
        %1756 = vmatpush2.msra.mxu0 0.0
        %1757 = vmatprep.subr.mxu0 0.0
        %1758 = vmatpush2.msra.mxu0 0.0
        %1759 = vmatprep.subr.mxu0 0.0
        %1760 = vmatpush2.msra.mxu0 0.0
        %1761 = vmatprep.subr.mxu0 0.0
        %1762 = vmatpush2.msra.mxu0 0.0
        %1763 = vmatprep.subr.mxu0 0.0
        %1764 = vmatpush2.msra.mxu0 0.0
        %1765 = vmatprep.subr.mxu0 0.0
        %1766 = vmatpush2.msra.mxu0 0.0
        %1767 = vmatprep.subr.mxu0 0.0
        %1768 = vmatpush2.msra.mxu0 0.0
        %1769 = vmatprep.mubr.f32.mxu0 0.0
        %1770 = vmatmul.mubr.f32.gmra.mxu0 %v1703
        %v1771 = vpop.f32.mrf.mxu0
        %v1772 = vadd.f32 0.0, %v1771
        %v1773 = vpop.f32.mrf.mxu0
        %1774 = vdwg.mxu0
        %v1775 = vmax.f32 %v1772, 0.0
        %v1776 = vld [vmem:[%s392] sm:$0xff]
        %v1777 = vld [vmem:[%s392 + $0x8] sm:$0xff]
        %v1778 = vld [vmem:[%s392 + $0x10] sm:$0xff]
        %v1779 = vld [vmem:[%s392 + $0x18] sm:$0xff]
        %v1780 = vld [vmem:[%s392 + $0x20] sm:$0xff]
        %v1781 = vld [vmem:[%s392 + $0x28] sm:$0xff]
        %v1782 = vld [vmem:[%s392 + $0x30] sm:$0xff]
        %v1783 = vld [vmem:[%s392 + $0x38] sm:$0xff]
        %vm1784 = vcmask 523264
        %v1786 = vsel %vm1784, %v1775, 0
        %1788 = vmatprep.subr.mxu0 0.0
        %1789 = vmatpush1.msra.mxu0 0.0
        %1790 = vmatprep.subr.mxu0 0.0
        %1791 = vmatpush1.msra.mxu0 0.0
        %1792 = vmatprep.subr.mxu0 0.0
        %1793 = vmatpush1.msra.mxu0 0.0
        %1794 = vmatprep.subr.mxu0 0.0
        %1795 = vmatpush1.msra.mxu0 0.0
        %1796 = vmatprep.subr.mxu0 0.0
        %1797 = vmatpush1.msra.mxu0 0.0
        %1798 = vmatprep.subr.mxu0 0.0
        %1799 = vmatpush1.msra.mxu0 0.0
        %1800 = vmatprep.subr.mxu0 0.0
        %1801 = vmatpush1.msra.mxu0 0.0
        %1802 = vmatprep.subr.mxu0 0.0
        %1803 = vmatpush1.msra.mxu0 0.0
        %1804 = vmatprep.subr.mxu0 0.0
        %1805 = vmatpush1.msra.mxu0 %v1783
        %1806 = vmatprep.subr.mxu0 0.0
        %1807 = vmatpush1.msra.mxu0 %v1782
        %1808 = vmatprep.subr.mxu0 0.0
        %1809 = vmatpush1.msra.mxu0 %v1781
        %1810 = vmatprep.subr.mxu0 0.0
        %1811 = vmatpush1.msra.mxu0 %v1780
        %1812 = vmatprep.subr.mxu0 0.0
        %1813 = vmatpush1.msra.mxu0 %v1779
        %1814 = vmatprep.subr.mxu0 0.0
        %1815 = vmatpush1.msra.mxu0 %v1778
        %1816 = vmatprep.subr.mxu0 0.0
        %1817 = vmatpush1.msra.mxu0 %v1777
        %1818 = vmatprep.subr.mxu0 0.0
        %1819 = vmatpush1.msra.mxu0 %v1776
        %1820 = vmatprep.subr.mxu0 0.0
        %1821 = vmatpush2.msra.mxu0 0.0
        %1822 = vmatprep.subr.mxu0 0.0
        %1823 = vmatpush2.msra.mxu0 0.0
        %1824 = vmatprep.subr.mxu0 0.0
        %1825 = vmatpush2.msra.mxu0 0.0
        %1826 = vmatprep.subr.mxu0 0.0
        %1827 = vmatpush2.msra.mxu0 0.0
        %1828 = vmatprep.subr.mxu0 0.0
        %1829 = vmatpush2.msra.mxu0 0.0
        %1830 = vmatprep.subr.mxu0 0.0
        %1831 = vmatpush2.msra.mxu0 0.0
        %1832 = vmatprep.subr.mxu0 0.0
        %1833 = vmatpush2.msra.mxu0 0.0
        %1834 = vmatprep.subr.mxu0 0.0
        %1835 = vmatpush2.msra.mxu0 0.0
        %1836 = vmatprep.subr.mxu0 0.0
        %1837 = vmatpush2.msra.mxu0 0.0
        %1838 = vmatprep.subr.mxu0 0.0
        %1839 = vmatpush2.msra.mxu0 0.0
        %1840 = vmatprep.subr.mxu0 0.0
        %1841 = vmatpush2.msra.mxu0 0.0
        %1842 = vmatprep.subr.mxu0 0.0
        %1843 = vmatpush2.msra.mxu0 0.0
        %1844 = vmatprep.subr.mxu0 0.0
        %1845 = vmatpush2.msra.mxu0 0.0
        %1846 = vmatprep.subr.mxu0 0.0
        %1847 = vmatpush2.msra.mxu0 0.0
        %1848 = vmatprep.subr.mxu0 0.0
        %1849 = vmatpush2.msra.mxu0 0.0
        %1850 = vmatprep.subr.mxu0 0.0
        %1851 = vmatpush2.msra.mxu0 0.0
        %1852 = vmatprep.mubr.f32.mxu0 0.0
        %1853 = vmatmul.mubr.f32.gmra.mxu0 %v1786
        %v1854 = vpop.f32.mrf.mxu0
        %v1855 = vadd.f32 %v1697, %v1854
        %v1856 = vpop.f32.mrf.mxu0
        %1857 = vdwg.mxu0
        %v1858 = vsel %vm421, %v1855, 0.0
        %1859 = vadd.xlane.f32.xlu0 %v1858
        %v1860 = vpop.xlane.xlu0 %1859
        %v1861 = vmul.f32 %v1860, %v1687
        %v1862 = vsub.f32 %v1855, %v1861
        %v1863 = vmul.f32 %v1862, %v1862
        %v1864 = vsel %vm421, %v1863, 0.0
        %1865 = vadd.xlane.f32.xlu0 %v1864
        %v1866 = vpop.xlane.xlu0 %1865
        %v1867 = vmul.f32 %v1866, %v1687
        %v1868 = vadd.f32 %v1867, 1e-05
        %v1869 = vrsqrt.pop %v1868
        %v1870 = vmul.f32 %v1862, %v1869
        %1871 = vst.msk [vmem:[#allocation2] sm:$0xff] %vm421, %v1870
        %p1872 = scmp.eq.s32.totalorder %s30, 1
        // Predicated region
        $region49: #{tpu_custom_call.1} parent=43 // pred_check
          %p1873 = pneg %p1872
        $region50: #{tpu_custom_call.1} parent=43 // pred_check_branch
          %1875 = sbr.rel (%p1873) target = $region52
        $region51: #{tpu_custom_call.1} parent=43 // pred_region
          %1876 = vst.msk [vmem:[%s358] sm:$0xff] %vm421, %v1870
        $region52: #{tpu_custom_call.1} parent=43 // pred_fallthru
          _
        %s1877 = sand.u32 %s201, 1
        %s1878 = scalar_lea.sflag [#allocation4], %s1877
        %s1879 = sand.u32 %s201, 1
        %s1880 = smul.addr %s1879, 8
        %s1881 = scalar_lea.vmem [#allocation3], %s1880
        %s1882 = sand.u32 %s229, 1
        %s1883 = scalar_lea.sflag [#allocation6], %s1882
        %s1884 = sand.u32 %s229, 1
        %s1885 = smul.addr %s1884, 32
        %s1886 = scalar_lea.vmem [#allocation5], %s1885
        // Predicated region
        $region53: #{tpu_custom_call.1} parent=43 // pred_check
          %p1887 = pneg %p211
        $region54: #{tpu_custom_call.1} parent=43 // pred_check_branch
          %1889 = sbr.rel (%p1887) target = $region56
        $region55: #{tpu_custom_call.1} parent=43 // pred_region
          %s1891 = ssub.s32 128, 128
          %1892 = vsyncadd %s1878, %s1891
          %s1893 = smul.addr %s29, 128
          %s1894 = scalar_lea.hbm %s6, %s1893
          %s1896 = sshll.u32 %s1881, 4
          %s1897 = int_to_ptr.vmem [resolvable:$true] %s1896
          %1899 = dma.vmem_to_hbm [thread:$0]  %s1897, 128, %s1894, %s1878
        $region56: #{tpu_custom_call.1} parent=43 // pred_fallthru
          _
        // Predicated region
        $region57: #{tpu_custom_call.1} parent=43 // pred_check
          %p1900 = pneg %p239
        $region58: #{tpu_custom_call.1} parent=43 // pred_check_branch
          %1902 = sbr.rel (%p1900) target = $region60
        $region59: #{tpu_custom_call.1} parent=43 // pred_region
          %s1903 = smul.u32 4, %s29
          %s1905 = ssub.s32 512, 512
          %1906 = vsyncadd %s1883, %s1905
          %s1907 = smul.addr %s30, 8
          %s1908 = sadd.s32 %s1903, %s1907
          %s1909 = smul.addr %s1908, 128
          %s1910 = scalar_lea.hbm %s7, %s1909
          %s1911 = sshll.u32 %s1886, 4
          %s1912 = int_to_ptr.vmem [resolvable:$true] %s1911
          %1917 = dma.vmem_to_hbm [thread:$0]  %s1912, 512, %s1910, %s1883, 128, 128, 8
        $region60: #{tpu_custom_call.1} parent=43 // pred_fallthru
          _
      $region44: #{tpu_custom_call.1} parent=5 // pred_fallthru
        _
      %p1918 = scmp.le.s32.totalorder 2, %s20
      // Predicated region
      $region61: #{tpu_custom_call.1} parent=5 // pred_check
        %p1919 = pneg %p1918
      $region62: #{tpu_custom_call.1} parent=5 // pred_check_branch
        %1921 = sbr.rel (%p1919) target = $region64
      $region63: #{tpu_custom_call.1} parent=5 // pred_region
        %s1922 = ssub.s32 %s20, 2
        // Predicated region
        $region65: #{tpu_custom_call.1} parent=63 // pred_check
          %p1923 = pneg %p217
        $region66: #{tpu_custom_call.1} parent=63 // pred_check_branch
          %1925 = sbr.rel (%p1923) target = $region68
        $region67: #{tpu_custom_call.1} parent=63 // pred_region
          %s1926 = sand.u32 %s202, 1
          %s1927 = scalar_lea.sflag [#allocation4], %s1926
          %s1928 = sand.u32 %s202, 1
          %s1929 = smul.addr %s1928, 8
          %s1930 = scalar_lea.vmem [#allocation3], %s1929
          %1931 = dma.done %s1927, 128
        $region68: #{tpu_custom_call.1} parent=63 // pred_fallthru
          _
        // Predicated region
        $region69: #{tpu_custom_call.1} parent=63 // pred_check
          %p1932 = pneg %p245
        $region70: #{tpu_custom_call.1} parent=63 // pred_check_branch
          %1934 = sbr.rel (%p1932) target = $region72
        $region71: #{tpu_custom_call.1} parent=63 // pred_region
          %s1935 = sand.u32 %s230, 1
          %s1936 = scalar_lea.sflag [#allocation6], %s1935
          %s1937 = sand.u32 %s230, 1
          %s1938 = smul.addr %s1937, 32
          %s1939 = scalar_lea.vmem [#allocation5], %s1938
          %1940 = dma.done %s1936, 512
        $region72: #{tpu_custom_call.1} parent=63 // pred_fallthru
          _
      $region64: #{tpu_custom_call.1} parent=5 // pred_fallthru
        _
    $region6: #{tpu_custom_call.1} parent=1 // loop_footer
      %s24 = sadd.s32 1, %s20
    $region7: #{tpu_custom_call.1} parent=1 // loop_footer_branch
      %19 = sbr.rel target = $region3
    $region8: #{tpu_custom_call.1} parent=1 // loop_exit
      _
    %1941 = vsyncpa [#allocation4], 1
    %s1942 = scalar_lea.sflag [#allocation4], 1
    %1943 = vsyncpa %s1942, 1
    %1944 = vsyncpa [#allocation6], 1
    %s1945 = scalar_lea.sflag [#allocation6], 1
    %1946 = vsyncpa %s1945, 1

</llo_original>
